<compile_context>
chip_gen: v7x
topology: tpu7x:2x2x1
jax: 0.10.0
libtpu: 0.0.40
codegen_flags: <defaults>
</compile_context>

<pallas_src>
import jax
import jax.numpy as jnp
from jax.experimental import pallas as pl
from jax.experimental.pallas import tpu as pltpu

# ---- config (small shapes consistent with the module's defaults) ----
B      = 2      # batch
S      = 16     # max_seq_len
H      = 32     # hidden_size
VOCAB  = 50
N_EVT  = 4      # len(event_list)
N_ROLE = 5      # len(role_list)
LE     = 3      # max_evt_len
LA     = 10     # max_ent_len
D_EVT  = 8      # event_embed_dim
M_DIM  = 64     # merged_embed_dim
T_EVT  = 2 * N_EVT + 1     # evt_tagger out dim
T_ENT  = 3                 # ent_tagger out dim
T_TAG  = T_EVT + T_ENT     # fused tagger out dim
T_R1   = 2 * N_ROLE        # role classifier hidden dim


def _pad8(n):
    return ((n + 7) // 8) * 8


# Packed weight-slab row offsets (all sublane-tile aligned, i.e. multiples of 8).
ROW_W_ENC  = 0                              # (H, H)
ROW_W_TAG  = ROW_W_ENC  + _pad8(H)          # (H, T_TAG)     = w_evt | w_ent
ROW_WM_ET  = ROW_W_TAG  + _pad8(H)          # (H+D_EVT, M)   = wm_evt ; wm_typ
ROW_WM_ENT = ROW_WM_ET  + _pad8(H + D_EVT)  # (H, M)
ROW_W_R1   = ROW_WM_ENT + _pad8(H)          # (M, T_R1)
ROW_W_R2   = ROW_W_R1   + _pad8(M_DIM)      # (T_R1, N_ROLE)
ROW_BIAS   = ROW_W_R2   + _pad8(T_R1)       # 5 bias rows (b_enc, b_tag, bm, b_r1, b_r2)
SLAB_ROWS  = ROW_BIAS   + 8
SLAB_COLS  = 128


def _joint_kernel(x_ref, masks_ref, evt_ref, w_ref, tag_o, role_o, m_scratch):
    # ---- static views into the packed weight slab (a single DMA'd input) ----
    w_enc  = w_ref[ROW_W_ENC:ROW_W_ENC + H, 0:H]
    w_tag  = w_ref[ROW_W_TAG:ROW_W_TAG + H, 0:T_TAG]
    wm_evt = w_ref[ROW_WM_ET:ROW_WM_ET + H, 0:M_DIM]
    wm_typ = w_ref[ROW_WM_ET + H:ROW_WM_ET + H + D_EVT, 0:M_DIM]
    wm_ent = w_ref[ROW_WM_ENT:ROW_WM_ENT + H, 0:M_DIM]
    w_r1   = w_ref[ROW_W_R1:ROW_W_R1 + M_DIM, 0:T_R1]
    w_r2   = w_ref[ROW_W_R2:ROW_W_R2 + T_R1, 0:N_ROLE]
    b_enc  = w_ref[ROW_BIAS + 0:ROW_BIAS + 1, 0:H]
    b_tag  = w_ref[ROW_BIAS + 1:ROW_BIAS + 2, 0:T_TAG]
    bm     = w_ref[ROW_BIAS + 2:ROW_BIAS + 3, 0:M_DIM]
    b_r1   = w_ref[ROW_BIAS + 3:ROW_BIAS + 4, 0:T_R1]
    b_r2   = w_ref[ROW_BIAS + 4:ROW_BIAS + 5, 0:N_ROLE]

    # TODO(synk): pretrained BERT encoder has no clean Pallas equivalent here;
    # replaced by a deterministic synthetic tanh(Linear) encoder.
    x = x_ref[...]                                                    # (B*S, H)
    seq = jnp.tanh(jnp.dot(x, w_enc, preferred_element_type=jnp.float32) + b_enc)

    # Fused evt/ent taggers (Linear + ReLU) in ONE matmul; split in the wrapper.
    tag_o[...] = jnp.maximum(
        jnp.dot(seq, w_tag, preferred_element_type=jnp.float32) + b_tag, 0.0)

    # Per-batch mention pooling (torch.bmm) + mention merge, unrolled over B.
    for b in range(B):
        seq_b  = seq[b * S:(b + 1) * S, :]                            # (S, H)
        pooled = jnp.dot(masks_ref[b], seq_b,
                         preferred_element_type=jnp.float32)          # (LE+LA, H)
        evt_m  = pooled[0:LE, :]                                      # (LE, H)
        ent_m  = pooled[LE:LE + LA, :]                                # (LA, H)
        evt_t  = evt_ref[b * LE:(b + 1) * LE, :]                      # (LE, D_EVT)

        # mention_merge_layer: Linear over concat([evt_m, ent_m, evt_t], -1) + ReLU,
        # decomposed into a sum of matmuls (identical math, no (LE,LA,2H+D) tensor).
        h_evt = (jnp.dot(evt_m, wm_evt, preferred_element_type=jnp.float32)
                 + jnp.dot(evt_t, wm_typ, preferred_element_type=jnp.float32))   # (LE, M)
        h_ent = jnp.dot(ent_m, wm_ent, preferred_element_type=jnp.float32) + bm  # (LA, M)

        # VPU-only expansion of the (LE, LA) grid into a flat scratch buffer.
        for e in range(LE):
            r0 = (b * LE + e) * LA
            m_scratch[r0:r0 + LA, :] = jnp.maximum(h_evt[e:e + 1, :] + h_ent, 0.0)

    # role_classification_layer over all B*LE*LA rows at once: 2 matmuls, 1 store.
    merged = m_scratch[...]                                           # (B*LE*LA, M)
    r1 = jnp.maximum(
        jnp.dot(merged, w_r1, preferred_element_type=jnp.float32) + b_r1, 0.0)
    role_o[...] = jnp.dot(r1, w_r2, preferred_element_type=jnp.float32) + b_r2


def pack_weight_slab(params):
    """Pack every weight and bias into a single (SLAB_ROWS, 128) f32 slab."""
    slab = jnp.zeros((SLAB_ROWS, SLAB_COLS), jnp.float32)

    def put(s, r, mat):
        return s.at[r:r + mat.shape[0], 0:mat.shape[1]].set(mat)

    slab = put(slab, ROW_W_ENC, params['w_enc'])
    slab = put(slab, ROW_W_TAG,
               jnp.concatenate([params['w_evt'], params['w_ent']], axis=1))
    slab = put(slab, ROW_WM_ET,
               jnp.concatenate([params['wm_evt'], params['wm_typ']], axis=0))
    slab = put(slab, ROW_WM_ENT, params['wm_ent'])
    slab = put(slab, ROW_W_R1, params['w_r1'])
    slab = put(slab, ROW_W_R2, params['w_r2'])
    slab = put(slab, ROW_BIAS + 0, params['b_enc'])
    slab = put(slab, ROW_BIAS + 1,
               jnp.concatenate([params['b_evt'], params['b_ent']], axis=1))
    slab = put(slab, ROW_BIAS + 2, params['bm'])
    slab = put(slab, ROW_BIAS + 3, params['b_r1'])
    slab = put(slab, ROW_BIAS + 4, params['b_r2'])
    return slab


def joint_model_forward(params, input_ids, attention_mask, tri_mask, ent_mask, evt_type_labels):
    # Glue (embedding gathers, mask concat, weight packing) in plain JAX.
    x_emb = (params['word_emb'][input_ids] * attention_mask[..., None]).reshape(B * S, H)
    evt_t = params['evt_table'][evt_type_labels].reshape(B * LE, D_EVT)
    masks = jnp.concatenate([tri_mask, ent_mask], axis=1)             # (B, LE+LA, S)
    slab = pack_weight_slab(params)

    tag, role = pl.pallas_call(
        _joint_kernel,
        out_shape=(
            jax.ShapeDtypeStruct((B * S, T_TAG), jnp.float32),
            jax.ShapeDtypeStruct((B * LE * LA, N_ROLE), jnp.float32),
        ),
        grid_spec=pltpu.PrefetchScalarGridSpec(
            num_scalar_prefetch=0,
            grid=(1,),                                                # single grid step
            in_specs=[
                pl.BlockSpec((B * S, H), lambda i: (0, 0)),
                pl.BlockSpec((B, LE + LA, S), lambda i: (0, 0, 0)),
                pl.BlockSpec((B * LE, D_EVT), lambda i: (0, 0)),
                pl.BlockSpec((SLAB_ROWS, SLAB_COLS), lambda i: (0, 0)),
            ],
            out_specs=[
                pl.BlockSpec((B * S, T_TAG), lambda i: (0, 0)),
                pl.BlockSpec((B * LE * LA, N_ROLE), lambda i: (0, 0)),
            ],
            scratch_shapes=[pltpu.VMEM((B * LE * LA, M_DIM), jnp.float32)],
        ),
        compiler_params=pltpu.CompilerParams(dimension_semantics=("arbitrary",)),
    )(x_emb, masks, evt_t, slab)

    evt_logits = tag[:, :T_EVT].reshape(B, S, T_EVT)
    ent_logits = tag[:, T_EVT:].reshape(B, S, T_ENT)
    role_logits = role.reshape(B, LE * LA, N_ROLE)                    # matches torch .view
    return evt_logits, ent_logits, role_logits


def reference(params, input_ids, attention_mask, tri_mask, ent_mask, evt_type_labels):
    # Pure-JAX mirror of the (synthetic-encoder) forward, using the torch-style
    # expand + concat + Linear formulation for an independent check.
    x = params['word_emb'][input_ids] * attention_mask[..., None]
    seq = jnp.tanh(x @ params['w_enc'] + params['b_enc'])
    evt_logits = jax.nn.relu(seq @ params['w_evt'] + params['b_evt'])
    ent_logits = jax.nn.relu(seq @ params['w_ent'] + params['b_ent'])
    evt_m = jnp.einsum('bls,bsh->blh', tri_mask, seq)
    ent_m = jnp.einsum('bls,bsh->blh', ent_mask, seq)
    evt_t = params['evt_table'][evt_type_labels]
    a = jnp.broadcast_to(evt_m[:, :, None, :], (B, LE, LA, H))
    b = jnp.broadcast_to(ent_m[:, None, :, :], (B, LE, LA, H))
    c = jnp.broadcast_to(evt_t[:, :, None, :], (B, LE, LA, D_EVT))
    merged = jnp.concatenate([a, b, c], -1).reshape(B, LE * LA, 2 * H + D_EVT)
    wm = jnp.concatenate([params['wm_evt'], params['wm_ent'], params['wm_typ']], 0)
    mh = jax.nn.relu(merged @ wm + params['bm'])
    r1 = jax.nn.relu(mh @ params['w_r1'] + params['b_r1'])
    role = r1 @ params['w_r2'] + params['b_r2']
    return evt_logits, ent_logits, role


def init_params(key):
    ks = jax.random.split(key, 16)

    def nrm(k, shape, scale=0.1):
        return (scale * jax.random.normal(k, shape)).astype(jnp.float32)

    evt_table = nrm(ks[1], (N_EVT, D_EVT))
    evt_table = evt_table.at[0].set(0.0)        # nn.Embedding padding_idx=0
    return dict(
        word_emb=nrm(ks[0], (VOCAB, H)),
        evt_table=evt_table,
        w_enc=nrm(ks[2], (H, H)), b_enc=nrm(ks[3], (1, H), 0.01),
        w_evt=nrm(ks[4], (H, T_EVT)), b_evt=nrm(ks[5], (1, T_EVT), 0.01),
        w_ent=nrm(ks[6], (H, T_ENT)), b_ent=nrm(ks[7], (1, T_ENT), 0.01),
        wm_evt=nrm(ks[8], (H, M_DIM)), wm_ent=nrm(ks[9], (H, M_DIM)),
        wm_typ=nrm(ks[10], (D_EVT, M_DIM)), bm=nrm(ks[11], (1, M_DIM), 0.01),
        w_r1=nrm(ks[12], (M_DIM, T_R1)), b_r1=nrm(ks[13], (1, T_R1), 0.01),
        w_r2=nrm(ks[14], (T_R1, N_ROLE)), b_r2=nrm(ks[15], (1, N_ROLE), 0.01),
    )


if __name__ == "__main__":
    key = jax.random.PRNGKey(0)
    pkey, k1, k2, k3, k4, k5 = jax.random.split(key, 6)
    params = init_params(pkey)

    input_ids = jax.random.randint(k1, (B, S), 0, VOCAB)
    attention_mask = (jax.random.uniform(k2, (B, S)) > 0.1).astype(jnp.float32)
    tri_mask = jax.nn.softmax(jax.random.normal(k3, (B, LE, S)), axis=-1).astype(jnp.float32)
    ent_mask = jax.nn.softmax(jax.random.normal(k4, (B, LA, S)), axis=-1).astype(jnp.float32)
    evt_type_labels = jax.random.randint(k5, (B, LE), 0, N_EVT)

    outs = joint_model_forward(params, input_ids, attention_mask,
                               tri_mask, ent_mask, evt_type_labels)
    outs = jax.block_until_ready(outs)

    refs = reference(params, input_ids, attention_mask, tri_mask, ent_mask, evt_type_labels)
    for o, r in zip(outs, refs):
        assert o.shape == r.shape, (o.shape, r.shape)
        assert jnp.allclose(o, r, atol=2e-2, rtol=2e-2), float(jnp.max(jnp.abs(o - r)))

    print("KERNEL_OK")
</pallas_src>

<mosaic_0001>
module attributes {stable_mosaic.version = 11 : i64} {
  func.func @_joint_kernel(%arg0: i32, %arg1: memref<32x32xf32, #tpu.memory_space<vmem>>, %arg2: memref<2x13x16xf32, #tpu.memory_space<vmem>>, %arg3: memref<6x8xf32, #tpu.memory_space<vmem>>, %arg4: memref<224x128xf32, #tpu.memory_space<vmem>>, %arg5: memref<32x12xf32, #tpu.memory_space<vmem>>, %arg6: memref<60x5xf32, #tpu.memory_space<vmem>>, %arg7: memref<60x64xf32, #tpu.memory_space<vmem>>) attributes {dimension_semantics = [#tpu.dimension_semantics<arbitrary>], iteration_bounds = array<i64: 1>, scalar_prefetch = 0 : i64, scratch_operands = 1 : i64, tpu.core_type = #tpu.core_type<tc>, window_params = [{pipeline_mode = #tpu.pipeline_mode<synchronous>, transform_indices = @transform_0, window_bounds = array<i64: 32, 32>}, {pipeline_mode = #tpu.pipeline_mode<synchronous>, transform_indices = @transform_1, window_bounds = array<i64: 2, 13, 16>}, {pipeline_mode = #tpu.pipeline_mode<synchronous>, transform_indices = @transform_2, window_bounds = array<i64: 6, 8>}, {pipeline_mode = #tpu.pipeline_mode<synchronous>, transform_indices = @transform_3, window_bounds = array<i64: 224, 128>}, {pipeline_mode = #tpu.pipeline_mode<synchronous>, transform_indices = @transform_4, window_bounds = array<i64: 32, 12>}, {pipeline_mode = #tpu.pipeline_mode<synchronous>, transform_indices = @transform_5, window_bounds = array<i64: 60, 5>}]} {
    %c0 = arith.constant 0 : index
    %c0_0 = arith.constant 0 : index
    %0 = vector.load %arg4[%c0, %c0_0] : memref<224x128xf32, #tpu.memory_space<vmem>>, vector<32x32xf32>
    %c32 = arith.constant 32 : index
    %c0_1 = arith.constant 0 : index
    %1 = vector.load %arg4[%c32, %c0_1] : memref<224x128xf32, #tpu.memory_space<vmem>>, vector<32x12xf32>
    %c64 = arith.constant 64 : index
    %c0_2 = arith.constant 0 : index
    %2 = vector.load %arg4[%c64, %c0_2] : memref<224x128xf32, #tpu.memory_space<vmem>>, vector<32x64xf32>
    %c96 = arith.constant 96 : index
    %c0_3 = arith.constant 0 : index
    %3 = vector.load %arg4[%c96, %c0_3] : memref<224x128xf32, #tpu.memory_space<vmem>>, vector<8x64xf32>
    %c104 = arith.constant 104 : index
    %c0_4 = arith.constant 0 : index
    %4 = vector.load %arg4[%c104, %c0_4] : memref<224x128xf32, #tpu.memory_space<vmem>>, vector<32x64xf32>
    %c136 = arith.constant 136 : index
    %c0_5 = arith.constant 0 : index
    %5 = vector.load %arg4[%c136, %c0_5] : memref<224x128xf32, #tpu.memory_space<vmem>>, vector<64x10xf32>
    %c200 = arith.constant 200 : index
    %c0_6 = arith.constant 0 : index
    %6 = vector.load %arg4[%c200, %c0_6] : memref<224x128xf32, #tpu.memory_space<vmem>>, vector<10x5xf32>
    %c216 = arith.constant 216 : index
    %c0_7 = arith.constant 0 : index
    %7 = vector.load %arg4[%c216, %c0_7] : memref<224x128xf32, #tpu.memory_space<vmem>>, vector<1x32xf32>
    %c217 = arith.constant 217 : index
    %c0_8 = arith.constant 0 : index
    %8 = vector.load %arg4[%c217, %c0_8] : memref<224x128xf32, #tpu.memory_space<vmem>>, vector<1x12xf32>
    %c218 = arith.constant 218 : index
    %c0_9 = arith.constant 0 : index
    %9 = vector.load %arg4[%c218, %c0_9] : memref<224x128xf32, #tpu.memory_space<vmem>>, vector<1x64xf32>
    %c219 = arith.constant 219 : index
    %c0_10 = arith.constant 0 : index
    %10 = vector.load %arg4[%c219, %c0_10] : memref<224x128xf32, #tpu.memory_space<vmem>>, vector<1x10xf32>
    %c220 = arith.constant 220 : index
    %c0_11 = arith.constant 0 : index
    %11 = vector.load %arg4[%c220, %c0_11] : memref<224x128xf32, #tpu.memory_space<vmem>>, vector<1x5xf32>
    %c0_12 = arith.constant 0 : index
    %c0_13 = arith.constant 0 : index
    %12 = vector.load %arg1[%c0_12, %c0_13] : memref<32x32xf32, #tpu.memory_space<vmem>>, vector<32x32xf32>
    %cst = arith.constant dense<0.000000e+00> : vector<32x32xf32>
    %13 = tpu.matmul %12, %0, %cst {dimension_numbers = #tpu.dot_dimension_numbers<[1], [0], [0], [1], [0, 0, 1, 1], [], []>} : vector<32x32xf32>, vector<32x32xf32>, vector<32x32xf32> -> vector<32x32xf32>
    %14 = vector.broadcast %7 : vector<1x32xf32> to vector<32x32xf32>
    %15 = arith.addf %13, %14 : vector<32x32xf32>
    %16 = math.tanh %15 : vector<32x32xf32>
    %cst_14 = arith.constant dense<0.000000e+00> : vector<32x12xf32>
    %17 = tpu.matmul %16, %1, %cst_14 {dimension_numbers = #tpu.dot_dimension_numbers<[1], [0], [0], [1], [0, 0, 1, 1], [], []>} : vector<32x32xf32>, vector<32x12xf32>, vector<32x12xf32> -> vector<32x12xf32>
    %18 = vector.broadcast %8 : vector<1x12xf32> to vector<32x12xf32>
    %19 = arith.addf %17, %18 : vector<32x12xf32>
    %cst_15 = arith.constant 0.000000e+00 : f32
    %20 = vector.broadcast %cst_15 : f32 to vector<32x12xf32>
    %21 = arith.maximumf %19, %20 : vector<32x12xf32>
    %c0_16 = arith.constant 0 : index
    %c0_17 = arith.constant 0 : index
    %22 = vector.load %arg5[%c0_16, %c0_17] : memref<32x12xf32, #tpu.memory_space<vmem>>, vector<32x12xf32>
    tpu.vector_store %arg5[%c0_16, %c0_17], %21 {strides = array<i32>} : memref<32x12xf32, #tpu.memory_space<vmem>>, vector<32x12xf32>,
    %23 = vector.extract_strided_slice %16 {offsets = [0, 0], sizes = [16, 32], strides = [1, 1]} : vector<32x32xf32> to vector<16x32xf32>
    %c0_18 = arith.constant 0 : index
    %c0_19 = arith.constant 0 : index
    %c0_20 = arith.constant 0 : index
    %24 = vector.load %arg2[%c0_18, %c0_19, %c0_20] : memref<2x13x16xf32, #tpu.memory_space<vmem>>, vector<1x13x16xf32>
    %25 = vector.shape_cast %24 : vector<1x13x16xf32> to vector<13x16xf32>
    %cst_21 = arith.constant dense<0.000000e+00> : vector<13x32xf32>
    %26 = tpu.matmul %25, %23, %cst_21 {dimension_numbers = #tpu.dot_dimension_numbers<[1], [0], [0], [1], [0, 0, 1, 1], [], []>} : vector<13x16xf32>, vector<16x32xf32>, vector<13x32xf32> -> vector<13x32xf32>
    %27 = vector.extract_strided_slice %26 {offsets = [0, 0], sizes = [3, 32], strides = [1, 1]} : vector<13x32xf32> to vector<3x32xf32>
    %28 = vector.extract_strided_slice %26 {offsets = [3, 0], sizes = [10, 32], strides = [1, 1]} : vector<13x32xf32> to vector<10x32xf32>
    %c0_22 = arith.constant 0 : index
    %c0_23 = arith.constant 0 : index
    %29 = vector.load %arg3[%c0_22, %c0_23] : memref<6x8xf32, #tpu.memory_space<vmem>>, vector<3x8xf32>
    %cst_24 = arith.constant dense<0.000000e+00> : vector<3x64xf32>
    %30 = tpu.matmul %27, %2, %cst_24 {dimension_numbers = #tpu.dot_dimension_numbers<[1], [0], [0], [1], [0, 0, 1, 1], [], []>} : vector<3x32xf32>, vector<32x64xf32>, vector<3x64xf32> -> vector<3x64xf32>
    %cst_25 = arith.constant dense<0.000000e+00> : vector<3x64xf32>
    %31 = tpu.matmul %29, %3, %cst_25 {dimension_numbers = #tpu.dot_dimension_numbers<[1], [0], [0], [1], [0, 0, 1, 1], [], []>} : vector<3x8xf32>, vector<8x64xf32>, vector<3x64xf32> -> vector<3x64xf32>
    %32 = arith.addf %30, %31 : vector<3x64xf32>
    %cst_26 = arith.constant dense<0.000000e+00> : vector<10x64xf32>
    %33 = tpu.matmul %28, %4, %cst_26 {dimension_numbers = #tpu.dot_dimension_numbers<[1], [0], [0], [1], [0, 0, 1, 1], [], []>} : vector<10x32xf32>, vector<32x64xf32>, vector<10x64xf32> -> vector<10x64xf32>
    %34 = vector.broadcast %9 : vector<1x64xf32> to vector<10x64xf32>
    %35 = arith.addf %33, %34 : vector<10x64xf32>
    %36 = vector.extract_strided_slice %32 {offsets = [0, 0], sizes = [1, 64], strides = [1, 1]} : vector<3x64xf32> to vector<1x64xf32>
    %37 = vector.broadcast %36 : vector<1x64xf32> to vector<10x64xf32>
    %38 = arith.addf %37, %35 : vector<10x64xf32>
    %cst_27 = arith.constant 0.000000e+00 : f32
    %39 = vector.broadcast %cst_27 : f32 to vector<10x64xf32>
    %40 = arith.maximumf %38, %39 : vector<10x64xf32>
    %c0_28 = arith.constant 0 : index
    %c0_29 = arith.constant 0 : index
    %41 = vector.load %arg7[%c0_28, %c0_29] : memref<60x64xf32, #tpu.memory_space<vmem>>, vector<10x64xf32>
    tpu.vector_store %arg7[%c0_28, %c0_29], %40 {strides = array<i32>} : memref<60x64xf32, #tpu.memory_space<vmem>>, vector<10x64xf32>,
    %42 = vector.extract_strided_slice %32 {offsets = [1, 0], sizes = [1, 64], strides = [1, 1]} : vector<3x64xf32> to vector<1x64xf32>
    %43 = vector.broadcast %42 : vector<1x64xf32> to vector<10x64xf32>
    %44 = arith.addf %43, %35 : vector<10x64xf32>
    %cst_30 = arith.constant 0.000000e+00 : f32
    %45 = vector.broadcast %cst_30 : f32 to vector<10x64xf32>
    %46 = arith.maximumf %44, %45 : vector<10x64xf32>
    %c10 = arith.constant 10 : index
    %c0_31 = arith.constant 0 : index
    %47 = vector.load %arg7[%c10, %c0_31] : memref<60x64xf32, #tpu.memory_space<vmem>>, vector<10x64xf32>
    tpu.vector_store %arg7[%c10, %c0_31], %46 {strides = array<i32>} : memref<60x64xf32, #tpu.memory_space<vmem>>, vector<10x64xf32>,
    %48 = vector.extract_strided_slice %32 {offsets = [2, 0], sizes = [1, 64], strides = [1, 1]} : vector<3x64xf32> to vector<1x64xf32>
    %49 = vector.broadcast %48 : vector<1x64xf32> to vector<10x64xf32>
    %50 = arith.addf %49, %35 : vector<10x64xf32>
    %cst_32 = arith.constant 0.000000e+00 : f32
    %51 = vector.broadcast %cst_32 : f32 to vector<10x64xf32>
    %52 = arith.maximumf %50, %51 : vector<10x64xf32>
    %c20 = arith.constant 20 : index
    %c0_33 = arith.constant 0 : index
    %53 = vector.load %arg7[%c20, %c0_33] : memref<60x64xf32, #tpu.memory_space<vmem>>, vector<10x64xf32>
    tpu.vector_store %arg7[%c20, %c0_33], %52 {strides = array<i32>} : memref<60x64xf32, #tpu.memory_space<vmem>>, vector<10x64xf32>,
    %54 = vector.extract_strided_slice %16 {offsets = [16, 0], sizes = [16, 32], strides = [1, 1]} : vector<32x32xf32> to vector<16x32xf32>
    %c1 = arith.constant 1 : index
    %c0_34 = arith.constant 0 : index
    %c0_35 = arith.constant 0 : index
    %55 = vector.load %arg2[%c1, %c0_34, %c0_35] : memref<2x13x16xf32, #tpu.memory_space<vmem>>, vector<1x13x16xf32>
    %56 = vector.shape_cast %55 : vector<1x13x16xf32> to vector<13x16xf32>
    %cst_36 = arith.constant dense<0.000000e+00> : vector<13x32xf32>
    %57 = tpu.matmul %56, %54, %cst_36 {dimension_numbers = #tpu.dot_dimension_numbers<[1], [0], [0], [1], [0, 0, 1, 1], [], []>} : vector<13x16xf32>, vector<16x32xf32>, vector<13x32xf32> -> vector<13x32xf32>
    %58 = vector.extract_strided_slice %57 {offsets = [0, 0], sizes = [3, 32], strides = [1, 1]} : vector<13x32xf32> to vector<3x32xf32>
    %59 = vector.extract_strided_slice %57 {offsets = [3, 0], sizes = [10, 32], strides = [1, 1]} : vector<13x32xf32> to vector<10x32xf32>
    %c3 = arith.constant 3 : index
    %c0_37 = arith.constant 0 : index
    %60 = vector.load %arg3[%c3, %c0_37] : memref<6x8xf32, #tpu.memory_space<vmem>>, vector<3x8xf32>
    %cst_38 = arith.constant dense<0.000000e+00> : vector<3x64xf32>
    %61 = tpu.matmul %58, %2, %cst_38 {dimension_numbers = #tpu.dot_dimension_numbers<[1], [0], [0], [1], [0, 0, 1, 1], [], []>} : vector<3x32xf32>, vector<32x64xf32>, vector<3x64xf32> -> vector<3x64xf32>
    %cst_39 = arith.constant dense<0.000000e+00> : vector<3x64xf32>
    %62 = tpu.matmul %60, %3, %cst_39 {dimension_numbers = #tpu.dot_dimension_numbers<[1], [0], [0], [1], [0, 0, 1, 1], [], []>} : vector<3x8xf32>, vector<8x64xf32>, vector<3x64xf32> -> vector<3x64xf32>
    %63 = arith.addf %61, %62 : vector<3x64xf32>
    %cst_40 = arith.constant dense<0.000000e+00> : vector<10x64xf32>
    %64 = tpu.matmul %59, %4, %cst_40 {dimension_numbers = #tpu.dot_dimension_numbers<[1], [0], [0], [1], [0, 0, 1, 1], [], []>} : vector<10x32xf32>, vector<32x64xf32>, vector<10x64xf32> -> vector<10x64xf32>
    %65 = vector.broadcast %9 : vector<1x64xf32> to vector<10x64xf32>
    %66 = arith.addf %64, %65 : vector<10x64xf32>
    %67 = vector.extract_strided_slice %63 {offsets = [0, 0], sizes = [1, 64], strides = [1, 1]} : vector<3x64xf32> to vector<1x64xf32>
    %68 = vector.broadcast %67 : vector<1x64xf32> to vector<10x64xf32>
    %69 = arith.addf %68, %66 : vector<10x64xf32>
    %cst_41 = arith.constant 0.000000e+00 : f32
    %70 = vector.broadcast %cst_41 : f32 to vector<10x64xf32>
    %71 = arith.maximumf %69, %70 : vector<10x64xf32>
    %c30 = arith.constant 30 : index
    %c0_42 = arith.constant 0 : index
    %72 = vector.load %arg7[%c30, %c0_42] : memref<60x64xf32, #tpu.memory_space<vmem>>, vector<10x64xf32>
    tpu.vector_store %arg7[%c30, %c0_42], %71 {strides = array<i32>} : memref<60x64xf32, #tpu.memory_space<vmem>>, vector<10x64xf32>,
    %73 = vector.extract_strided_slice %63 {offsets = [1, 0], sizes = [1, 64], strides = [1, 1]} : vector<3x64xf32> to vector<1x64xf32>
    %74 = vector.broadcast %73 : vector<1x64xf32> to vector<10x64xf32>
    %75 = arith.addf %74, %66 : vector<10x64xf32>
    %cst_43 = arith.constant 0.000000e+00 : f32
    %76 = vector.broadcast %cst_43 : f32 to vector<10x64xf32>
    %77 = arith.maximumf %75, %76 : vector<10x64xf32>
    %c40 = arith.constant 40 : index
    %c0_44 = arith.constant 0 : index
    %78 = vector.load %arg7[%c40, %c0_44] : memref<60x64xf32, #tpu.memory_space<vmem>>, vector<10x64xf32>
    tpu.vector_store %arg7[%c40, %c0_44], %77 {strides = array<i32>} : memref<60x64xf32, #tpu.memory_space<vmem>>, vector<10x64xf32>,
    %79 = vector.extract_strided_slice %63 {offsets = [2, 0], sizes = [1, 64], strides = [1, 1]} : vector<3x64xf32> to vector<1x64xf32>
    %80 = vector.broadcast %79 : vector<1x64xf32> to vector<10x64xf32>
    %81 = arith.addf %80, %66 : vector<10x64xf32>
    %cst_45 = arith.constant 0.000000e+00 : f32
    %82 = vector.broadcast %cst_45 : f32 to vector<10x64xf32>
    %83 = arith.maximumf %81, %82 : vector<10x64xf32>
    %c50 = arith.constant 50 : index
    %c0_46 = arith.constant 0 : index
    %84 = vector.load %arg7[%c50, %c0_46] : memref<60x64xf32, #tpu.memory_space<vmem>>, vector<10x64xf32>
    tpu.vector_store %arg7[%c50, %c0_46], %83 {strides = array<i32>} : memref<60x64xf32, #tpu.memory_space<vmem>>, vector<10x64xf32>,
    %c0_47 = arith.constant 0 : index
    %c0_48 = arith.constant 0 : index
    %85 = vector.load %arg7[%c0_47, %c0_48] : memref<60x64xf32, #tpu.memory_space<vmem>>, vector<60x64xf32>
    %cst_49 = arith.constant dense<0.000000e+00> : vector<60x10xf32>
    %86 = tpu.matmul %85, %5, %cst_49 {dimension_numbers = #tpu.dot_dimension_numbers<[1], [0], [0], [1], [0, 0, 1, 1], [], []>} : vector<60x64xf32>, vector<64x10xf32>, vector<60x10xf32> -> vector<60x10xf32>
    %87 = vector.broadcast %10 : vector<1x10xf32> to vector<60x10xf32>
    %88 = arith.addf %86, %87 : vector<60x10xf32>
    %cst_50 = arith.constant 0.000000e+00 : f32
    %89 = vector.broadcast %cst_50 : f32 to vector<60x10xf32>
    %90 = arith.maximumf %88, %89 : vector<60x10xf32>
    %cst_51 = arith.constant dense<0.000000e+00> : vector<60x5xf32>
    %91 = tpu.matmul %90, %6, %cst_51 {dimension_numbers = #tpu.dot_dimension_numbers<[1], [0], [0], [1], [0, 0, 1, 1], [], []>} : vector<60x10xf32>, vector<10x5xf32>, vector<60x5xf32> -> vector<60x5xf32>
    %92 = vector.broadcast %11 : vector<1x5xf32> to vector<60x5xf32>
    %93 = arith.addf %91, %92 : vector<60x5xf32>
    %c0_52 = arith.constant 0 : index
    %c0_53 = arith.constant 0 : index
    %94 = vector.load %arg6[%c0_52, %c0_53] : memref<60x5xf32, #tpu.memory_space<vmem>>, vector<60x5xf32>
    tpu.vector_store %arg6[%c0_52, %c0_53], %93 {strides = array<i32>} : memref<60x5xf32, #tpu.memory_space<vmem>>, vector<60x5xf32>,
    return
  }
  func.func @transform_0(%arg0: i32) -> (i32, i32) {
    %c0_i32 = arith.constant 0 : i32
    %c0_i32_0 = arith.constant 0 : i32
    %c0_i32_1 = arith.constant 0 : i32
    return %c0_i32, %c0_i32_0 : i32, i32
  }
  func.func @transform_1(%arg0: i32) -> (i32, i32, i32) {
    %c0_i32 = arith.constant 0 : i32
    %c0_i32_0 = arith.constant 0 : i32
    %c0_i32_1 = arith.constant 0 : i32
    %c0_i32_2 = arith.constant 0 : i32
    return %c0_i32, %c0_i32_0, %c0_i32_1 : i32, i32, i32
  }
  func.func @transform_2(%arg0: i32) -> (i32, i32) {
    %c0_i32 = arith.constant 0 : i32
    %c0_i32_0 = arith.constant 0 : i32
    %c0_i32_1 = arith.constant 0 : i32
    return %c0_i32, %c0_i32_0 : i32, i32
  }
  func.func @transform_3(%arg0: i32) -> (i32, i32) {
    %c0_i32 = arith.constant 0 : i32
    %c0_i32_0 = arith.constant 0 : i32
    %c0_i32_1 = arith.constant 0 : i32
    return %c0_i32, %c0_i32_0 : i32, i32
  }
  func.func @transform_4(%arg0: i32) -> (i32, i32) {
    %c0_i32 = arith.constant 0 : i32
    %c0_i32_0 = arith.constant 0 : i32
    %c0_i32_1 = arith.constant 0 : i32
    return %c0_i32, %c0_i32_0 : i32, i32
  }
  func.func @transform_5(%arg0: i32) -> (i32, i32) {
    %c0_i32 = arith.constant 0 : i32
    %c0_i32_0 = arith.constant 0 : i32
    %c0_i32_1 = arith.constant 0 : i32
    return %c0_i32, %c0_i32_0 : i32, i32
  }
}

</mosaic_0001>

<llo_original>
// kernel: tpu_custom_call.1
$region0: #{tpu_custom_call.1}
  #allocation0 [shape = 'u32[]', space=smem, size = 0x4, offset = 0x4, fixed_abs, tag = 'smem constant byte address 0x4 - core index']
  #allocation1 [shape = 'u32[144,128]{1,0:T(1,128)}', space=vmem, size = 0x12000, scoped, tag = 'internal scratch']
  #allocation2 [shape = 'f32[60,64]{1,0:T(8,128)}', space=vmem, size = 0x8000, scoped, tag = 'scratch operand']
  %s0 = inlined_call_operand.vmem [shape: f32[32,32], index: 0, kind: input, shape index: {}]
  %s1 = inlined_call_operand.vmem [shape: f32[2,13,16], index: 1, kind: input, shape index: {}]
  %s2 = inlined_call_operand.vmem [shape: f32[6,8], index: 2, kind: input, shape index: {}]
  %s3 = inlined_call_operand.hbm [shape: f32[224,128], index: 3, kind: input, shape index: {}]
  %s4 = inlined_call_operand.vmem [shape: f32[32,12], index: 4, kind: output, shape index: {0}]
  %s5 = inlined_call_operand.vmem [shape: f32[60,5], index: 5, kind: output, shape index: {1}]
  %6 = xla_tuple %s4, %s5
  %s7 = sld [smem:[#allocation0]]
  $region38: #{tpu_custom_call.1} parent=0
    _
  %s9 = ssub.s32 1, %s7
  %s10 = scalar_select 0, %s9, %s7
  $region1: #{tpu_custom_call.1} parent=0
    #allocation3 [shape = 'u8[114688]{0}', space=vmem, size = 0x1c000, scoped, tag = 'input window, operand 3, single buffered']
    #allocation4 [shape = 's32[1]{0}', space=sflag, size = 0x4, scoped, tag = 'scoped memory for tpu_custom_call.1']
    %11 = vsyncpa [#allocation4], 0
    // Predicated region
    $region2: #{tpu_custom_call.1} parent=1 // pred_check
      _
    $region3: #{tpu_custom_call.1} parent=1 // pred_check_branch
      %13 = sbr.rel (0) target = $region5
    $region4: #{tpu_custom_call.1} parent=1 // pred_region
      _
    $region5: #{tpu_custom_call.1} parent=1 // pred_fallthru
      _
    // Predicated region
    $region6: #{tpu_custom_call.1} parent=1 // pred_check
      _
    $region7: #{tpu_custom_call.1} parent=1 // pred_check_branch
      %15 = sbr.rel (0) target = $region9
    $region8: #{tpu_custom_call.1} parent=1 // pred_region
      _
    $region9: #{tpu_custom_call.1} parent=1 // pred_fallthru
      _
    // Predicated region
    $region10: #{tpu_custom_call.1} parent=1 // pred_check
      _
    $region11: #{tpu_custom_call.1} parent=1 // pred_check_branch
      %17 = sbr.rel (0) target = $region13
    $region12: #{tpu_custom_call.1} parent=1 // pred_region
      _
    $region13: #{tpu_custom_call.1} parent=1 // pred_fallthru
      _
    // Predicated region
    $region14: #{tpu_custom_call.1} parent=1 // pred_check
      _
    $region15: #{tpu_custom_call.1} parent=1 // pred_check_branch
      %19 = sbr.rel (0) target = $region17
    $region16: #{tpu_custom_call.1} parent=1 // pred_region
      %s21 = ssub.s32 3584, 3584
      %22 = vsyncadd [#allocation4], %s21
      %s23 = sshll.u32 [#allocation3], 4
      %s24 = int_to_ptr.vmem [resolvable:$true] %s23
      %29 = dma.hbm_to_vmem [thread:$0]  %s3, 3584, %s24, [#allocation4], 128, 128, 8
    $region17: #{tpu_custom_call.1} parent=1 // pred_fallthru
      _
    // Predicated region
    $region18: #{tpu_custom_call.1} parent=1 // pred_check
      _
    $region19: #{tpu_custom_call.1} parent=1 // pred_check_branch
      %31 = sbr.rel (0) target = $region21
    $region20: #{tpu_custom_call.1} parent=1 // pred_region
      %32 = dma.done [#allocation4], 3584
    $region21: #{tpu_custom_call.1} parent=1 // pred_fallthru
      _
    %v33 = vld [vmem:[#allocation3] sm:$0xff]
    %v34 = vld [vmem:[#allocation3 + $0x8] sm:$0xff]
    %v35 = vld [vmem:[#allocation3 + $0x10] sm:$0xff]
    %v36 = vld [vmem:[#allocation3 + $0x18] sm:$0xff]
    %v37 = vld [vmem:[#allocation3 + $0x20] sm:$0xff]
    %v38 = vld [vmem:[#allocation3 + $0x28] sm:$0xff]
    %v39 = vld [vmem:[#allocation3 + $0x30] sm:$0xff]
    %v40 = vld [vmem:[#allocation3 + $0x38] sm:$0xff]
    %v41 = vld [vmem:[#allocation3 + $0x40] sm:$0xff]
    %v42 = vld [vmem:[#allocation3 + $0x48] sm:$0xff]
    %v43 = vld [vmem:[#allocation3 + $0x50] sm:$0xff]
    %v44 = vld [vmem:[#allocation3 + $0x58] sm:$0xff]
    %v45 = vld [vmem:[#allocation3 + $0x60] sm:$0xff]
    %v46 = vld [vmem:[#allocation3 + $0x68] sm:$0xff]
    %v47 = vld [vmem:[#allocation3 + $0x70] sm:$0xff]
    %v48 = vld [vmem:[#allocation3 + $0x78] sm:$0xff]
    %v49 = vld [vmem:[#allocation3 + $0x80] sm:$0xff]
    %v50 = vld [vmem:[#allocation3 + $0x88] sm:$0xff]
    %v51 = vld [vmem:[#allocation3 + $0x90] sm:$0xff]
    %v52 = vld [vmem:[#allocation3 + $0x98] sm:$0xff]
    %v53 = vld [vmem:[#allocation3 + $0xa0] sm:$0xff]
    %v54 = vld [vmem:[#allocation3 + $0xa8] sm:$0xff]
    %v55 = vld [vmem:[#allocation3 + $0xb0] sm:$0xff]
    %v56 = vld [vmem:[#allocation3 + $0xb8] sm:$0xff]
    %v57 = vld [vmem:[#allocation3 + $0xc0] sm:$0xff]
    %v58 = vld [vmem:[#allocation3 + $0xc8] sm:$0xff]
    %v59 = vld [vmem:[#allocation3 + $0xd0] sm:$0x3]
    %v60 = vld [vmem:[#allocation3 + $0xd8] sm:$0x1]
    %v61 = vld [vmem:[#allocation3 + $0xd9] sm:$0x1]
    %v62 = vld [vmem:[#allocation3 + $0xda] sm:$0x1]
    %v63 = vld [vmem:[#allocation3 + $0xdb] sm:$0x1]
    %v64 = vld [vmem:[#allocation3 + $0xdc] sm:$0x1]
    %v65 = vld [vmem:[%s0] sm:$0xff]
    %v66 = vld [vmem:[%s0 + $0x8] sm:$0xff]
    %v67 = vld [vmem:[%s0 + $0x10] sm:$0xff]
    %v68 = vld [vmem:[%s0 + $0x18] sm:$0xff]
    %v69 = vlaneseq
    %v70 = vshrl.u32 %v69, 7
    %v71 = vsub.s32 0, %v70
    %v72 = vrot.slane %v60, %v71
    %vm73 = vcmask 261120
    %v75 = vsel %vm73, %v65, 0
    %v78 = vsel %vm73, %v66, 0
    %v81 = vsel %vm73, %v67, 0
    %v84 = vsel %vm73, %v68, 0
    %86 = vmatprep.subr.mxu0 0.0
    %87 = vmatpush1.msra.mxu0 %v33
    %88 = vmatprep.subr.mxu0 0.0
    %89 = vmatpush1.msra.mxu0 %v34
    %90 = vmatprep.subr.mxu0 0.0
    %91 = vmatpush1.msra.mxu0 %v35
    %92 = vmatprep.subr.mxu0 0.0
    %93 = vmatpush1.msra.mxu0 %v36
    %94 = vmatprep.subr.mxu0 0.0
    %95 = vmatpush1.msra.mxu0 0.0
    %96 = vmatprep.subr.mxu0 0.0
    %97 = vmatpush1.msra.mxu0 0.0
    %98 = vmatprep.subr.mxu0 0.0
    %99 = vmatpush1.msra.mxu0 0.0
    %100 = vmatprep.subr.mxu0 0.0
    %101 = vmatpush1.msra.mxu0 0.0
    %102 = vmatprep.subr.mxu0 0.0
    %103 = vmatpush1.msra.mxu0 0.0
    %104 = vmatprep.subr.mxu0 0.0
    %105 = vmatpush1.msra.mxu0 0.0
    %106 = vmatprep.subr.mxu0 0.0
    %107 = vmatpush1.msra.mxu0 0.0
    %108 = vmatprep.subr.mxu0 0.0
    %109 = vmatpush1.msra.mxu0 0.0
    %110 = vmatprep.subr.mxu0 0.0
    %111 = vmatpush1.msra.mxu0 0.0
    %112 = vmatprep.subr.mxu0 0.0
    %113 = vmatpush1.msra.mxu0 0.0
    %114 = vmatprep.subr.mxu0 0.0
    %115 = vmatpush1.msra.mxu0 0.0
    %116 = vmatprep.subr.mxu0 0.0
    %117 = vmatpush1.msra.mxu0 0.0
    %118 = vmatprep.subr.mxu0 0.0
    %119 = vmatpush1.msra.mxu0 0.0
    %120 = vmatprep.subr.mxu0 0.0
    %121 = vmatpush1.msra.mxu0 0.0
    %122 = vmatprep.subr.mxu0 0.0
    %123 = vmatpush1.msra.mxu0 0.0
    %124 = vmatprep.subr.mxu0 0.0
    %125 = vmatpush1.msra.mxu0 0.0
    %126 = vmatprep.subr.mxu0 0.0
    %127 = vmatpush1.msra.mxu0 0.0
    %128 = vmatprep.subr.mxu0 0.0
    %129 = vmatpush1.msra.mxu0 0.0
    %130 = vmatprep.subr.mxu0 0.0
    %131 = vmatpush1.msra.mxu0 0.0
    %132 = vmatprep.subr.mxu0 0.0
    %133 = vmatpush1.msra.mxu0 0.0
    %134 = vmatprep.subr.mxu0 0.0
    %135 = vmatpush1.msra.mxu0 0.0
    %136 = vmatprep.subr.mxu0 0.0
    %137 = vmatpush1.msra.mxu0 0.0
    %138 = vmatprep.subr.mxu0 0.0
    %139 = vmatpush1.msra.mxu0 0.0
    %140 = vmatprep.subr.mxu0 0.0
    %141 = vmatpush1.msra.mxu0 0.0
    %142 = vmatprep.subr.mxu0 0.0
    %143 = vmatpush1.msra.mxu0 0.0
    %144 = vmatprep.subr.mxu0 0.0
    %145 = vmatpush1.msra.mxu0 0.0
    %146 = vmatprep.subr.mxu0 0.0
    %147 = vmatpush1.msra.mxu0 0.0
    %148 = vmatprep.subr.mxu0 0.0
    %149 = vmatpush1.msra.mxu0 0.0
    %150 = vmatprep.mubr.f32.mxu0 0.0
    %151 = vmatmul.mubr.f32.gmra.mrb[0].mxu0 %v75
    %v152 = vpop.f32.mrb[0].mxu0
    %v153 = vadd.f32 %v72, %v152
    %v154 = vpop.f32.mrb[0].mxu0
    %155 = vmatprep.mubr.f32.mxu0 0.0
    %156 = vmatmul.mubr.f32.gmra.mrb[0].mxu0 %v78
    %v157 = vpop.f32.mrb[0].mxu0
    %v158 = vadd.f32 %v72, %v157
    %v159 = vpop.f32.mrb[0].mxu0
    %160 = vmatprep.mubr.f32.mxu0 0.0
    %161 = vmatmul.mubr.f32.gmra.mrb[0].mxu0 %v81
    %v162 = vpop.f32.mrb[0].mxu0
    %v163 = vadd.f32 %v72, %v162
    %v164 = vpop.f32.mrb[0].mxu0
    %165 = vmatprep.mubr.f32.mxu0 0.0
    %166 = vmatmul.mubr.f32.gmra.mrb[0].mxu0 %v84
    %v167 = vpop.f32.mrb[0].mxu0
    %v168 = vadd.f32 %v72, %v167
    %v169 = vpop.f32.mrb[0].mxu0
    %170 = vdwg.mxu0
    %v171 = vtanh.pop %v153
    %v172 = vtanh.pop %v158
    %v173 = vtanh.pop %v163
    %v174 = vtanh.pop %v168
    %v175 = vlaneseq
    %v176 = vshrl.u32 %v175, 7
    %v177 = vsub.s32 0, %v176
    %v178 = vrot.slane %v61, %v177
    %v180 = vsel %vm73, %v171, 0
    %v183 = vsel %vm73, %v172, 0
    %v186 = vsel %vm73, %v173, 0
    %v189 = vsel %vm73, %v174, 0
    %191 = vmatprep.subr.mxu0 0.0
    %192 = vmatpush1.msra.mxu0 %v37
    %193 = vmatprep.subr.mxu0 0.0
    %194 = vmatpush1.msra.mxu0 %v38
    %195 = vmatprep.subr.mxu0 0.0
    %196 = vmatpush1.msra.mxu0 %v39
    %197 = vmatprep.subr.mxu0 0.0
    %198 = vmatpush1.msra.mxu0 %v40
    %199 = vmatprep.subr.mxu0 0.0
    %200 = vmatpush1.msra.mxu0 0.0
    %201 = vmatprep.subr.mxu0 0.0
    %202 = vmatpush1.msra.mxu0 0.0
    %203 = vmatprep.subr.mxu0 0.0
    %204 = vmatpush1.msra.mxu0 0.0
    %205 = vmatprep.subr.mxu0 0.0
    %206 = vmatpush1.msra.mxu0 0.0
    %207 = vmatprep.subr.mxu0 0.0
    %208 = vmatpush1.msra.mxu0 0.0
    %209 = vmatprep.subr.mxu0 0.0
    %210 = vmatpush1.msra.mxu0 0.0
    %211 = vmatprep.subr.mxu0 0.0
    %212 = vmatpush1.msra.mxu0 0.0
    %213 = vmatprep.subr.mxu0 0.0
    %214 = vmatpush1.msra.mxu0 0.0
    %215 = vmatprep.subr.mxu0 0.0
    %216 = vmatpush1.msra.mxu0 0.0
    %217 = vmatprep.subr.mxu0 0.0
    %218 = vmatpush1.msra.mxu0 0.0
    %219 = vmatprep.subr.mxu0 0.0
    %220 = vmatpush1.msra.mxu0 0.0
    %221 = vmatprep.subr.mxu0 0.0
    %222 = vmatpush1.msra.mxu0 0.0
    %223 = vmatprep.subr.mxu0 0.0
    %224 = vmatpush1.msra.mxu0 0.0
    %225 = vmatprep.subr.mxu0 0.0
    %226 = vmatpush1.msra.mxu0 0.0
    %227 = vmatprep.subr.mxu0 0.0
    %228 = vmatpush1.msra.mxu0 0.0
    %229 = vmatprep.subr.mxu0 0.0
    %230 = vmatpush1.msra.mxu0 0.0
    %231 = vmatprep.subr.mxu0 0.0
    %232 = vmatpush1.msra.mxu0 0.0
    %233 = vmatprep.subr.mxu0 0.0
    %234 = vmatpush1.msra.mxu0 0.0
    %235 = vmatprep.subr.mxu0 0.0
    %236 = vmatpush1.msra.mxu0 0.0
    %237 = vmatprep.subr.mxu0 0.0
    %238 = vmatpush1.msra.mxu0 0.0
    %239 = vmatprep.subr.mxu0 0.0
    %240 = vmatpush1.msra.mxu0 0.0
    %241 = vmatprep.subr.mxu0 0.0
    %242 = vmatpush1.msra.mxu0 0.0
    %243 = vmatprep.subr.mxu0 0.0
    %244 = vmatpush1.msra.mxu0 0.0
    %245 = vmatprep.subr.mxu0 0.0
    %246 = vmatpush1.msra.mxu0 0.0
    %247 = vmatprep.subr.mxu0 0.0
    %248 = vmatpush1.msra.mxu0 0.0
    %249 = vmatprep.subr.mxu0 0.0
    %250 = vmatpush1.msra.mxu0 0.0
    %251 = vmatprep.subr.mxu0 0.0
    %252 = vmatpush1.msra.mxu0 0.0
    %253 = vmatprep.subr.mxu0 0.0
    %254 = vmatpush1.msra.mxu0 0.0
    %255 = vmatprep.mubr.f32.mxu0 0.0
    %256 = vmatmul.mubr.f32.gmra.mrb[0].mxu0 %v180
    %v257 = vpop.f32.mrb[0].mxu0
    %v258 = vadd.f32 %v178, %v257
    %v259 = vpop.f32.mrb[0].mxu0
    %260 = vmatprep.mubr.f32.mxu0 0.0
    %261 = vmatmul.mubr.f32.gmra.mrb[0].mxu0 %v183
    %v262 = vpop.f32.mrb[0].mxu0
    %v263 = vadd.f32 %v178, %v262
    %v264 = vpop.f32.mrb[0].mxu0
    %265 = vmatprep.mubr.f32.mxu0 0.0
    %266 = vmatmul.mubr.f32.gmra.mrb[0].mxu0 %v186
    %v267 = vpop.f32.mrb[0].mxu0
    %v268 = vadd.f32 %v178, %v267
    %v269 = vpop.f32.mrb[0].mxu0
    %270 = vmatprep.mubr.f32.mxu0 0.0
    %271 = vmatmul.mubr.f32.gmra.mrb[0].mxu0 %v189
    %v272 = vpop.f32.mrb[0].mxu0
    %v273 = vadd.f32 %v178, %v272
    %v274 = vpop.f32.mrb[0].mxu0
    %275 = vdwg.mxu0
    %v276 = vmax.f32 %v258, 0.0
    %v277 = vmax.f32 %v263, 0.0
    %v278 = vmax.f32 %v268, 0.0
    %v279 = vmax.f32 %v273, 0.0
    %vm280 = vcmask 97280
    %281 = vst.msk [vmem:[%s4] sm:$0xff] %vm280, %v276
    %282 = vst.msk [vmem:[%s4 + $0x8] sm:$0xff] %vm280, %v277
    %283 = vst.msk [vmem:[%s4 + $0x10] sm:$0xff] %vm280, %v278
    %284 = vst.msk [vmem:[%s4 + $0x18] sm:$0xff] %vm280, %v279
    %v285 = vld [vmem:[%s1] sm:$0xff]
    %v286 = vld [vmem:[%s1 + $0x8] sm:$0x1f]
    %vm287 = vcmask 130048
    %v289 = vsel %vm287, %v285, 0
    %v292 = vsel %vm287, %v286, 0
    %294 = vmatprep.subr.mxu0 0.0
    %295 = vmatpush1.msra.mxu0 %v171
    %296 = vmatprep.subr.mxu0 0.0
    %297 = vmatpush1.msra.mxu0 %v172
    %298 = vmatprep.subr.mxu0 0.0
    %299 = vmatpush1.msra.mxu0 0.0
    %300 = vmatprep.subr.mxu0 0.0
    %301 = vmatpush1.msra.mxu0 0.0
    %302 = vmatprep.subr.mxu0 0.0
    %303 = vmatpush1.msra.mxu0 0.0
    %304 = vmatprep.subr.mxu0 0.0
    %305 = vmatpush1.msra.mxu0 0.0
    %306 = vmatprep.subr.mxu0 0.0
    %307 = vmatpush1.msra.mxu0 0.0
    %308 = vmatprep.subr.mxu0 0.0
    %309 = vmatpush1.msra.mxu0 0.0
    %310 = vmatprep.subr.mxu0 0.0
    %311 = vmatpush1.msra.mxu0 0.0
    %312 = vmatprep.subr.mxu0 0.0
    %313 = vmatpush1.msra.mxu0 0.0
    %314 = vmatprep.subr.mxu0 0.0
    %315 = vmatpush1.msra.mxu0 0.0
    %316 = vmatprep.subr.mxu0 0.0
    %317 = vmatpush1.msra.mxu0 0.0
    %318 = vmatprep.subr.mxu0 0.0
    %319 = vmatpush1.msra.mxu0 0.0
    %320 = vmatprep.subr.mxu0 0.0
    %321 = vmatpush1.msra.mxu0 0.0
    %322 = vmatprep.subr.mxu0 0.0
    %323 = vmatpush1.msra.mxu0 0.0
    %324 = vmatprep.subr.mxu0 0.0
    %325 = vmatpush1.msra.mxu0 0.0
    %326 = vmatprep.subr.mxu0 0.0
    %327 = vmatpush1.msra.mxu0 0.0
    %328 = vmatprep.subr.mxu0 0.0
    %329 = vmatpush1.msra.mxu0 0.0
    %330 = vmatprep.subr.mxu0 0.0
    %331 = vmatpush1.msra.mxu0 0.0
    %332 = vmatprep.subr.mxu0 0.0
    %333 = vmatpush1.msra.mxu0 0.0
    %334 = vmatprep.subr.mxu0 0.0
    %335 = vmatpush1.msra.mxu0 0.0
    %336 = vmatprep.subr.mxu0 0.0
    %337 = vmatpush1.msra.mxu0 0.0
    %338 = vmatprep.subr.mxu0 0.0
    %339 = vmatpush1.msra.mxu0 0.0
    %340 = vmatprep.subr.mxu0 0.0
    %341 = vmatpush1.msra.mxu0 0.0
    %342 = vmatprep.subr.mxu0 0.0
    %343 = vmatpush1.msra.mxu0 0.0
    %344 = vmatprep.subr.mxu0 0.0
    %345 = vmatpush1.msra.mxu0 0.0
    %346 = vmatprep.subr.mxu0 0.0
    %347 = vmatpush1.msra.mxu0 0.0
    %348 = vmatprep.subr.mxu0 0.0
    %349 = vmatpush1.msra.mxu0 0.0
    %350 = vmatprep.subr.mxu0 0.0
    %351 = vmatpush1.msra.mxu0 0.0
    %352 = vmatprep.subr.mxu0 0.0
    %353 = vmatpush1.msra.mxu0 0.0
    %354 = vmatprep.subr.mxu0 0.0
    %355 = vmatpush1.msra.mxu0 0.0
    %356 = vmatprep.subr.mxu0 0.0
    %357 = vmatpush1.msra.mxu0 0.0
    %358 = vmatprep.mubr.f32.mxu0 0.0
    %359 = vmatmul.mubr.f32.gmra.mrb[0].mxu0 %v289
    %v360 = vpop.f32.mrb[0].mxu0
    %v361 = vadd.f32 0.0, %v360
    %v362 = vpop.f32.mrb[0].mxu0
    %363 = vmatprep.mubr.f32.mxu0 0.0
    %364 = vmatmul.mubr.f32.gmra.mrb[0].mxu0 %v292
    %v365 = vpop.f32.mrb[0].mxu0
    %v366 = vadd.f32 0.0, %v365
    %v367 = vpop.f32.mrb[0].mxu0
    %368 = vdwg.mxu0
    %v369 = vld [vmem:[%s2] sm:$0x7]
    %vm370 = vcmask 64512
    %v372 = vsel %vm370, %v369, 0
    %374 = vmatprep.subr.mxu0 0.0
    %375 = vmatpush1.msra.mxu0 %v45
    %376 = vmatprep.subr.mxu0 0.0
    %377 = vmatpush1.msra.mxu0 0.0
    %378 = vmatprep.subr.mxu0 0.0
    %379 = vmatpush1.msra.mxu0 0.0
    %380 = vmatprep.subr.mxu0 0.0
    %381 = vmatpush1.msra.mxu0 0.0
    %382 = vmatprep.subr.mxu0 0.0
    %383 = vmatpush1.msra.mxu0 0.0
    %384 = vmatprep.subr.mxu0 0.0
    %385 = vmatpush1.msra.mxu0 0.0
    %386 = vmatprep.subr.mxu0 0.0
    %387 = vmatpush1.msra.mxu0 0.0
    %388 = vmatprep.subr.mxu0 0.0
    %389 = vmatpush1.msra.mxu0 0.0
    %390 = vmatprep.subr.mxu0 0.0
    %391 = vmatpush1.msra.mxu0 0.0
    %392 = vmatprep.subr.mxu0 0.0
    %393 = vmatpush1.msra.mxu0 0.0
    %394 = vmatprep.subr.mxu0 0.0
    %395 = vmatpush1.msra.mxu0 0.0
    %396 = vmatprep.subr.mxu0 0.0
    %397 = vmatpush1.msra.mxu0 0.0
    %398 = vmatprep.subr.mxu0 0.0
    %399 = vmatpush1.msra.mxu0 0.0
    %400 = vmatprep.subr.mxu0 0.0
    %401 = vmatpush1.msra.mxu0 0.0
    %402 = vmatprep.subr.mxu0 0.0
    %403 = vmatpush1.msra.mxu0 0.0
    %404 = vmatprep.subr.mxu0 0.0
    %405 = vmatpush1.msra.mxu0 0.0
    %406 = vmatprep.subr.mxu0 0.0
    %407 = vmatpush1.msra.mxu0 0.0
    %408 = vmatprep.subr.mxu0 0.0
    %409 = vmatpush1.msra.mxu0 0.0
    %410 = vmatprep.subr.mxu0 0.0
    %411 = vmatpush1.msra.mxu0 0.0
    %412 = vmatprep.subr.mxu0 0.0
    %413 = vmatpush1.msra.mxu0 0.0
    %414 = vmatprep.subr.mxu0 0.0
    %415 = vmatpush1.msra.mxu0 0.0
    %416 = vmatprep.subr.mxu0 0.0
    %417 = vmatpush1.msra.mxu0 0.0
    %418 = vmatprep.subr.mxu0 0.0
    %419 = vmatpush1.msra.mxu0 0.0
    %420 = vmatprep.subr.mxu0 0.0
    %421 = vmatpush1.msra.mxu0 0.0
    %422 = vmatprep.subr.mxu0 0.0
    %423 = vmatpush1.msra.mxu0 0.0
    %424 = vmatprep.subr.mxu0 0.0
    %425 = vmatpush1.msra.mxu0 0.0
    %426 = vmatprep.subr.mxu0 0.0
    %427 = vmatpush1.msra.mxu0 0.0
    %428 = vmatprep.subr.mxu0 0.0
    %429 = vmatpush1.msra.mxu0 0.0
    %430 = vmatprep.subr.mxu0 0.0
    %431 = vmatpush1.msra.mxu0 0.0
    %432 = vmatprep.subr.mxu0 0.0
    %433 = vmatpush1.msra.mxu0 0.0
    %434 = vmatprep.subr.mxu0 0.0
    %435 = vmatpush1.msra.mxu0 0.0
    %436 = vmatprep.subr.mxu0 0.0
    %437 = vmatpush1.msra.mxu0 0.0
    %438 = vmatprep.mubr.f32.mxu0 0.0
    %439 = vmatmul.mubr.f32.gmra.mrb[0].mxu0 %v372
    %v440 = vpop.f32.mrb[0].mxu0
    %v441 = vadd.f32 0.0, %v440
    %v442 = vpop.f32.mrb[0].mxu0
    %443 = vdwg.mxu0
    %v445 = vsel %vm73, %v361, 0
    %447 = vmatprep.subr.mxu0 0.0
    %448 = vmatpush1.msra.mxu0 %v41
    %449 = vmatprep.subr.mxu0 0.0
    %450 = vmatpush1.msra.mxu0 %v42
    %451 = vmatprep.subr.mxu0 0.0
    %452 = vmatpush1.msra.mxu0 %v43
    %453 = vmatprep.subr.mxu0 0.0
    %454 = vmatpush1.msra.mxu0 %v44
    %455 = vmatprep.subr.mxu0 0.0
    %456 = vmatpush1.msra.mxu0 0.0
    %457 = vmatprep.subr.mxu0 0.0
    %458 = vmatpush1.msra.mxu0 0.0
    %459 = vmatprep.subr.mxu0 0.0
    %460 = vmatpush1.msra.mxu0 0.0
    %461 = vmatprep.subr.mxu0 0.0
    %462 = vmatpush1.msra.mxu0 0.0
    %463 = vmatprep.subr.mxu0 0.0
    %464 = vmatpush1.msra.mxu0 0.0
    %465 = vmatprep.subr.mxu0 0.0
    %466 = vmatpush1.msra.mxu0 0.0
    %467 = vmatprep.subr.mxu0 0.0
    %468 = vmatpush1.msra.mxu0 0.0
    %469 = vmatprep.subr.mxu0 0.0
    %470 = vmatpush1.msra.mxu0 0.0
    %471 = vmatprep.subr.mxu0 0.0
    %472 = vmatpush1.msra.mxu0 0.0
    %473 = vmatprep.subr.mxu0 0.0
    %474 = vmatpush1.msra.mxu0 0.0
    %475 = vmatprep.subr.mxu0 0.0
    %476 = vmatpush1.msra.mxu0 0.0
    %477 = vmatprep.subr.mxu0 0.0
    %478 = vmatpush1.msra.mxu0 0.0
    %479 = vmatprep.subr.mxu0 0.0
    %480 = vmatpush1.msra.mxu0 0.0
    %481 = vmatprep.subr.mxu0 0.0
    %482 = vmatpush1.msra.mxu0 0.0
    %483 = vmatprep.subr.mxu0 0.0
    %484 = vmatpush1.msra.mxu0 0.0
    %485 = vmatprep.subr.mxu0 0.0
    %486 = vmatpush1.msra.mxu0 0.0
    %487 = vmatprep.subr.mxu0 0.0
    %488 = vmatpush1.msra.mxu0 0.0
    %489 = vmatprep.subr.mxu0 0.0
    %490 = vmatpush1.msra.mxu0 0.0
    %491 = vmatprep.subr.mxu0 0.0
    %492 = vmatpush1.msra.mxu0 0.0
    %493 = vmatprep.subr.mxu0 0.0
    %494 = vmatpush1.msra.mxu0 0.0
    %495 = vmatprep.subr.mxu0 0.0
    %496 = vmatpush1.msra.mxu0 0.0
    %497 = vmatprep.subr.mxu0 0.0
    %498 = vmatpush1.msra.mxu0 0.0
    %499 = vmatprep.subr.mxu0 0.0
    %500 = vmatpush1.msra.mxu0 0.0
    %501 = vmatprep.subr.mxu0 0.0
    %502 = vmatpush1.msra.mxu0 0.0
    %503 = vmatprep.subr.mxu0 0.0
    %504 = vmatpush1.msra.mxu0 0.0
    %505 = vmatprep.subr.mxu0 0.0
    %506 = vmatpush1.msra.mxu0 0.0
    %507 = vmatprep.subr.mxu0 0.0
    %508 = vmatpush1.msra.mxu0 0.0
    %509 = vmatprep.subr.mxu0 0.0
    %510 = vmatpush1.msra.mxu0 0.0
    %511 = vmatprep.mubr.f32.mxu0 0.0
    %512 = vmatmul.mubr.f32.gmra.mrb[0].mxu0 %v445
    %v513 = vpop.f32.mrb[0].mxu0
    %v514 = vadd.f32 %v441, %v513
    %v515 = vpop.f32.mrb[0].mxu0
    %516 = vdwg.mxu0
    %v517 = vlaneseq
    %v518 = vshrl.u32 %v517, 7
    %v519 = vsub.s32 0, %v518
    %v520 = vrot.slane %v62, %v519
    %vm522 = vcmask 1044480
    %v523 = vrot.slane %v361, 3
    %v524 = vrot.slane %v366, 3
    %v525 = vsel %vm522, %v523, %v524
    %v526 = vsel %vm73, %v525, 0
    %v528 = vsel %vm73, %v524, 0
    %530 = vmatprep.subr.mxu0 0.0
    %531 = vmatpush1.msra.mxu0 %v46
    %532 = vmatprep.subr.mxu0 0.0
    %533 = vmatpush1.msra.mxu0 %v47
    %534 = vmatprep.subr.mxu0 0.0
    %535 = vmatpush1.msra.mxu0 %v48
    %536 = vmatprep.subr.mxu0 0.0
    %537 = vmatpush1.msra.mxu0 %v49
    %538 = vmatprep.subr.mxu0 0.0
    %539 = vmatpush1.msra.mxu0 0.0
    %540 = vmatprep.subr.mxu0 0.0
    %541 = vmatpush1.msra.mxu0 0.0
    %542 = vmatprep.subr.mxu0 0.0
    %543 = vmatpush1.msra.mxu0 0.0
    %544 = vmatprep.subr.mxu0 0.0
    %545 = vmatpush1.msra.mxu0 0.0
    %546 = vmatprep.subr.mxu0 0.0
    %547 = vmatpush1.msra.mxu0 0.0
    %548 = vmatprep.subr.mxu0 0.0
    %549 = vmatpush1.msra.mxu0 0.0
    %550 = vmatprep.subr.mxu0 0.0
    %551 = vmatpush1.msra.mxu0 0.0
    %552 = vmatprep.subr.mxu0 0.0
    %553 = vmatpush1.msra.mxu0 0.0
    %554 = vmatprep.subr.mxu0 0.0
    %555 = vmatpush1.msra.mxu0 0.0
    %556 = vmatprep.subr.mxu0 0.0
    %557 = vmatpush1.msra.mxu0 0.0
    %558 = vmatprep.subr.mxu0 0.0
    %559 = vmatpush1.msra.mxu0 0.0
    %560 = vmatprep.subr.mxu0 0.0
    %561 = vmatpush1.msra.mxu0 0.0
    %562 = vmatprep.subr.mxu0 0.0
    %563 = vmatpush1.msra.mxu0 0.0
    %564 = vmatprep.subr.mxu0 0.0
    %565 = vmatpush1.msra.mxu0 0.0
    %566 = vmatprep.subr.mxu0 0.0
    %567 = vmatpush1.msra.mxu0 0.0
    %568 = vmatprep.subr.mxu0 0.0
    %569 = vmatpush1.msra.mxu0 0.0
    %570 = vmatprep.subr.mxu0 0.0
    %571 = vmatpush1.msra.mxu0 0.0
    %572 = vmatprep.subr.mxu0 0.0
    %573 = vmatpush1.msra.mxu0 0.0
    %574 = vmatprep.subr.mxu0 0.0
    %575 = vmatpush1.msra.mxu0 0.0
    %576 = vmatprep.subr.mxu0 0.0
    %577 = vmatpush1.msra.mxu0 0.0
    %578 = vmatprep.subr.mxu0 0.0
    %579 = vmatpush1.msra.mxu0 0.0
    %580 = vmatprep.subr.mxu0 0.0
    %581 = vmatpush1.msra.mxu0 0.0
    %582 = vmatprep.subr.mxu0 0.0
    %583 = vmatpush1.msra.mxu0 0.0
    %584 = vmatprep.subr.mxu0 0.0
    %585 = vmatpush1.msra.mxu0 0.0
    %586 = vmatprep.subr.mxu0 0.0
    %587 = vmatpush1.msra.mxu0 0.0
    %588 = vmatprep.subr.mxu0 0.0
    %589 = vmatpush1.msra.mxu0 0.0
    %590 = vmatprep.subr.mxu0 0.0
    %591 = vmatpush1.msra.mxu0 0.0
    %592 = vmatprep.subr.mxu0 0.0
    %593 = vmatpush1.msra.mxu0 0.0
    %594 = vmatprep.mubr.f32.mxu0 0.0
    %595 = vmatmul.mubr.f32.gmra.mrb[0].mxu0 %v526
    %v596 = vpop.f32.mrb[0].mxu0
    %v597 = vadd.f32 %v520, %v596
    %v598 = vpop.f32.mrb[0].mxu0
    %599 = vmatprep.mubr.f32.mxu0 0.0
    %600 = vmatmul.mubr.f32.gmra.mrb[0].mxu0 %v528
    %v601 = vpop.f32.mrb[0].mxu0
    %v602 = vadd.f32 %v520, %v601
    %v603 = vpop.f32.mrb[0].mxu0
    %604 = vdwg.mxu0
    %v605 = vlaneseq
    %v606 = vshrl.u32 %v605, 7
    %v607 = vsub.s32 0, %v606
    %v608 = vrot.slane %v514, %v607
    %v609 = vadd.f32 %v608, %v597
    %v610 = vadd.f32 %v608, %v602
    %v611 = vmax.f32 %v609, 0.0
    %v612 = vmax.f32 %v610, 0.0
    %vm613 = vcmask 523264
    %614 = vst.msk [vmem:[#allocation2] sm:$0xff] %vm613, %v611
    %vm615 = vcmask 517120
    %616 = vst.msk [vmem:[#allocation2 + $0x8] sm:$0x3] %vm615, %v612
    %v617 = vlaneseq
    %v618 = vshrl.u32 %v617, 7
    %v619 = vsub.s32 1, %v618
    %v620 = vrot.slane %v514, %v619
    %v621 = vadd.f32 %v620, %v597
    %v622 = vadd.f32 %v620, %v602
    %v623 = vmax.f32 %v621, 0.0
    %v624 = vmax.f32 %v622, 0.0
    %625 = vst.msk [vmem:[#allocation2 + $0xa] sm:$0xff] %vm613, %v623
    %626 = vst.msk [vmem:[#allocation2 + $0x12] sm:$0x3] %vm615, %v624
    %v627 = vlaneseq
    %v628 = vshrl.u32 %v627, 7
    %v629 = vsub.s32 2, %v628
    %v630 = vrot.slane %v514, %v629
    %v631 = vadd.f32 %v630, %v597
    %v632 = vadd.f32 %v630, %v602
    %v633 = vmax.f32 %v631, 0.0
    %v634 = vmax.f32 %v632, 0.0
    %635 = vst.msk [vmem:[#allocation2 + $0x14] sm:$0xff] %vm613, %v633
    %636 = vst.msk [vmem:[#allocation2 + $0x1c] sm:$0x3] %vm615, %v634
    %s637 = scalar_lea.vmem %s1, 16
    %v638 = vld [vmem:[%s637] sm:$0xff]
    %v639 = vld [vmem:[%s637 + $0x8] sm:$0x1f]
    %v641 = vsel %vm287, %v638, 0
    %v644 = vsel %vm287, %v639, 0
    %646 = vmatprep.subr.mxu0 0.0
    %647 = vmatpush1.msra.mxu0 %v173
    %648 = vmatprep.subr.mxu0 0.0
    %649 = vmatpush1.msra.mxu0 %v174
    %650 = vmatprep.subr.mxu0 0.0
    %651 = vmatpush1.msra.mxu0 0.0
    %652 = vmatprep.subr.mxu0 0.0
    %653 = vmatpush1.msra.mxu0 0.0
    %654 = vmatprep.subr.mxu0 0.0
    %655 = vmatpush1.msra.mxu0 0.0
    %656 = vmatprep.subr.mxu0 0.0
    %657 = vmatpush1.msra.mxu0 0.0
    %658 = vmatprep.subr.mxu0 0.0
    %659 = vmatpush1.msra.mxu0 0.0
    %660 = vmatprep.subr.mxu0 0.0
    %661 = vmatpush1.msra.mxu0 0.0
    %662 = vmatprep.subr.mxu0 0.0
    %663 = vmatpush1.msra.mxu0 0.0
    %664 = vmatprep.subr.mxu0 0.0
    %665 = vmatpush1.msra.mxu0 0.0
    %666 = vmatprep.subr.mxu0 0.0
    %667 = vmatpush1.msra.mxu0 0.0
    %668 = vmatprep.subr.mxu0 0.0
    %669 = vmatpush1.msra.mxu0 0.0
    %670 = vmatprep.subr.mxu0 0.0
    %671 = vmatpush1.msra.mxu0 0.0
    %672 = vmatprep.subr.mxu0 0.0
    %673 = vmatpush1.msra.mxu0 0.0
    %674 = vmatprep.subr.mxu0 0.0
    %675 = vmatpush1.msra.mxu0 0.0
    %676 = vmatprep.subr.mxu0 0.0
    %677 = vmatpush1.msra.mxu0 0.0
    %678 = vmatprep.subr.mxu0 0.0
    %679 = vmatpush1.msra.mxu0 0.0
    %680 = vmatprep.subr.mxu0 0.0
    %681 = vmatpush1.msra.mxu0 0.0
    %682 = vmatprep.subr.mxu0 0.0
    %683 = vmatpush1.msra.mxu0 0.0
    %684 = vmatprep.subr.mxu0 0.0
    %685 = vmatpush1.msra.mxu0 0.0
    %686 = vmatprep.subr.mxu0 0.0
    %687 = vmatpush1.msra.mxu0 0.0
    %688 = vmatprep.subr.mxu0 0.0
    %689 = vmatpush1.msra.mxu0 0.0
    %690 = vmatprep.subr.mxu0 0.0
    %691 = vmatpush1.msra.mxu0 0.0
    %692 = vmatprep.subr.mxu0 0.0
    %693 = vmatpush1.msra.mxu0 0.0
    %694 = vmatprep.subr.mxu0 0.0
    %695 = vmatpush1.msra.mxu0 0.0
    %696 = vmatprep.subr.mxu0 0.0
    %697 = vmatpush1.msra.mxu0 0.0
    %698 = vmatprep.subr.mxu0 0.0
    %699 = vmatpush1.msra.mxu0 0.0
    %700 = vmatprep.subr.mxu0 0.0
    %701 = vmatpush1.msra.mxu0 0.0
    %702 = vmatprep.subr.mxu0 0.0
    %703 = vmatpush1.msra.mxu0 0.0
    %704 = vmatprep.subr.mxu0 0.0
    %705 = vmatpush1.msra.mxu0 0.0
    %706 = vmatprep.subr.mxu0 0.0
    %707 = vmatpush1.msra.mxu0 0.0
    %708 = vmatprep.subr.mxu0 0.0
    %709 = vmatpush1.msra.mxu0 0.0
    %710 = vmatprep.mubr.f32.mxu0 0.0
    %711 = vmatmul.mubr.f32.gmra.mrb[0].mxu0 %v641
    %v712 = vpop.f32.mrb[0].mxu0
    %v713 = vadd.f32 0.0, %v712
    %v714 = vpop.f32.mrb[0].mxu0
    %715 = vmatprep.mubr.f32.mxu0 0.0
    %716 = vmatmul.mubr.f32.gmra.mrb[0].mxu0 %v644
    %v717 = vpop.f32.mrb[0].mxu0
    %v718 = vadd.f32 0.0, %v717
    %v719 = vpop.f32.mrb[0].mxu0
    %720 = vdwg.mxu0
    %v721 = vld [vmem:[%s2 + $0x3] sm:$0x7]
    %v723 = vsel %vm370, %v721, 0
    %725 = vmatprep.subr.mxu0 0.0
    %726 = vmatpush1.msra.mxu0 %v45
    %727 = vmatprep.subr.mxu0 0.0
    %728 = vmatpush1.msra.mxu0 0.0
    %729 = vmatprep.subr.mxu0 0.0
    %730 = vmatpush1.msra.mxu0 0.0
    %731 = vmatprep.subr.mxu0 0.0
    %732 = vmatpush1.msra.mxu0 0.0
    %733 = vmatprep.subr.mxu0 0.0
    %734 = vmatpush1.msra.mxu0 0.0
    %735 = vmatprep.subr.mxu0 0.0
    %736 = vmatpush1.msra.mxu0 0.0
    %737 = vmatprep.subr.mxu0 0.0
    %738 = vmatpush1.msra.mxu0 0.0
    %739 = vmatprep.subr.mxu0 0.0
    %740 = vmatpush1.msra.mxu0 0.0
    %741 = vmatprep.subr.mxu0 0.0
    %742 = vmatpush1.msra.mxu0 0.0
    %743 = vmatprep.subr.mxu0 0.0
    %744 = vmatpush1.msra.mxu0 0.0
    %745 = vmatprep.subr.mxu0 0.0
    %746 = vmatpush1.msra.mxu0 0.0
    %747 = vmatprep.subr.mxu0 0.0
    %748 = vmatpush1.msra.mxu0 0.0
    %749 = vmatprep.subr.mxu0 0.0
    %750 = vmatpush1.msra.mxu0 0.0
    %751 = vmatprep.subr.mxu0 0.0
    %752 = vmatpush1.msra.mxu0 0.0
    %753 = vmatprep.subr.mxu0 0.0
    %754 = vmatpush1.msra.mxu0 0.0
    %755 = vmatprep.subr.mxu0 0.0
    %756 = vmatpush1.msra.mxu0 0.0
    %757 = vmatprep.subr.mxu0 0.0
    %758 = vmatpush1.msra.mxu0 0.0
    %759 = vmatprep.subr.mxu0 0.0
    %760 = vmatpush1.msra.mxu0 0.0
    %761 = vmatprep.subr.mxu0 0.0
    %762 = vmatpush1.msra.mxu0 0.0
    %763 = vmatprep.subr.mxu0 0.0
    %764 = vmatpush1.msra.mxu0 0.0
    %765 = vmatprep.subr.mxu0 0.0
    %766 = vmatpush1.msra.mxu0 0.0
    %767 = vmatprep.subr.mxu0 0.0
    %768 = vmatpush1.msra.mxu0 0.0
    %769 = vmatprep.subr.mxu0 0.0
    %770 = vmatpush1.msra.mxu0 0.0
    %771 = vmatprep.subr.mxu0 0.0
    %772 = vmatpush1.msra.mxu0 0.0
    %773 = vmatprep.subr.mxu0 0.0
    %774 = vmatpush1.msra.mxu0 0.0
    %775 = vmatprep.subr.mxu0 0.0
    %776 = vmatpush1.msra.mxu0 0.0
    %777 = vmatprep.subr.mxu0 0.0
    %778 = vmatpush1.msra.mxu0 0.0
    %779 = vmatprep.subr.mxu0 0.0
    %780 = vmatpush1.msra.mxu0 0.0
    %781 = vmatprep.subr.mxu0 0.0
    %782 = vmatpush1.msra.mxu0 0.0
    %783 = vmatprep.subr.mxu0 0.0
    %784 = vmatpush1.msra.mxu0 0.0
    %785 = vmatprep.subr.mxu0 0.0
    %786 = vmatpush1.msra.mxu0 0.0
    %787 = vmatprep.subr.mxu0 0.0
    %788 = vmatpush1.msra.mxu0 0.0
    %789 = vmatprep.mubr.f32.mxu0 0.0
    %790 = vmatmul.mubr.f32.gmra.mrb[0].mxu0 %v723
    %v791 = vpop.f32.mrb[0].mxu0
    %v792 = vadd.f32 0.0, %v791
    %v793 = vpop.f32.mrb[0].mxu0
    %794 = vdwg.mxu0
    %v796 = vsel %vm73, %v713, 0
    %798 = vmatprep.subr.mxu0 0.0
    %799 = vmatpush1.msra.mxu0 %v41
    %800 = vmatprep.subr.mxu0 0.0
    %801 = vmatpush1.msra.mxu0 %v42
    %802 = vmatprep.subr.mxu0 0.0
    %803 = vmatpush1.msra.mxu0 %v43
    %804 = vmatprep.subr.mxu0 0.0
    %805 = vmatpush1.msra.mxu0 %v44
    %806 = vmatprep.subr.mxu0 0.0
    %807 = vmatpush1.msra.mxu0 0.0
    %808 = vmatprep.subr.mxu0 0.0
    %809 = vmatpush1.msra.mxu0 0.0
    %810 = vmatprep.subr.mxu0 0.0
    %811 = vmatpush1.msra.mxu0 0.0
    %812 = vmatprep.subr.mxu0 0.0
    %813 = vmatpush1.msra.mxu0 0.0
    %814 = vmatprep.subr.mxu0 0.0
    %815 = vmatpush1.msra.mxu0 0.0
    %816 = vmatprep.subr.mxu0 0.0
    %817 = vmatpush1.msra.mxu0 0.0
    %818 = vmatprep.subr.mxu0 0.0
    %819 = vmatpush1.msra.mxu0 0.0
    %820 = vmatprep.subr.mxu0 0.0
    %821 = vmatpush1.msra.mxu0 0.0
    %822 = vmatprep.subr.mxu0 0.0
    %823 = vmatpush1.msra.mxu0 0.0
    %824 = vmatprep.subr.mxu0 0.0
    %825 = vmatpush1.msra.mxu0 0.0
    %826 = vmatprep.subr.mxu0 0.0
    %827 = vmatpush1.msra.mxu0 0.0
    %828 = vmatprep.subr.mxu0 0.0
    %829 = vmatpush1.msra.mxu0 0.0
    %830 = vmatprep.subr.mxu0 0.0
    %831 = vmatpush1.msra.mxu0 0.0
    %832 = vmatprep.subr.mxu0 0.0
    %833 = vmatpush1.msra.mxu0 0.0
    %834 = vmatprep.subr.mxu0 0.0
    %835 = vmatpush1.msra.mxu0 0.0
    %836 = vmatprep.subr.mxu0 0.0
    %837 = vmatpush1.msra.mxu0 0.0
    %838 = vmatprep.subr.mxu0 0.0
    %839 = vmatpush1.msra.mxu0 0.0
    %840 = vmatprep.subr.mxu0 0.0
    %841 = vmatpush1.msra.mxu0 0.0
    %842 = vmatprep.subr.mxu0 0.0
    %843 = vmatpush1.msra.mxu0 0.0
    %844 = vmatprep.subr.mxu0 0.0
    %845 = vmatpush1.msra.mxu0 0.0
    %846 = vmatprep.subr.mxu0 0.0
    %847 = vmatpush1.msra.mxu0 0.0
    %848 = vmatprep.subr.mxu0 0.0
    %849 = vmatpush1.msra.mxu0 0.0
    %850 = vmatprep.subr.mxu0 0.0
    %851 = vmatpush1.msra.mxu0 0.0
    %852 = vmatprep.subr.mxu0 0.0
    %853 = vmatpush1.msra.mxu0 0.0
    %854 = vmatprep.subr.mxu0 0.0
    %855 = vmatpush1.msra.mxu0 0.0
    %856 = vmatprep.subr.mxu0 0.0
    %857 = vmatpush1.msra.mxu0 0.0
    %858 = vmatprep.subr.mxu0 0.0
    %859 = vmatpush1.msra.mxu0 0.0
    %860 = vmatprep.subr.mxu0 0.0
    %861 = vmatpush1.msra.mxu0 0.0
    %862 = vmatprep.mubr.f32.mxu0 0.0
    %863 = vmatmul.mubr.f32.gmra.mrb[0].mxu0 %v796
    %v864 = vpop.f32.mrb[0].mxu0
    %v865 = vadd.f32 %v792, %v864
    %v866 = vpop.f32.mrb[0].mxu0
    %867 = vdwg.mxu0
    %v869 = vrot.slane %v713, 3
    %v870 = vrot.slane %v718, 3
    %v871 = vsel %vm522, %v869, %v870
    %v872 = vsel %vm73, %v871, 0
    %v874 = vsel %vm73, %v870, 0
    %876 = vmatprep.subr.mxu0 0.0
    %877 = vmatpush1.msra.mxu0 %v46
    %878 = vmatprep.subr.mxu0 0.0
    %879 = vmatpush1.msra.mxu0 %v47
    %880 = vmatprep.subr.mxu0 0.0
    %881 = vmatpush1.msra.mxu0 %v48
    %882 = vmatprep.subr.mxu0 0.0
    %883 = vmatpush1.msra.mxu0 %v49
    %884 = vmatprep.subr.mxu0 0.0
    %885 = vmatpush1.msra.mxu0 0.0
    %886 = vmatprep.subr.mxu0 0.0
    %887 = vmatpush1.msra.mxu0 0.0
    %888 = vmatprep.subr.mxu0 0.0
    %889 = vmatpush1.msra.mxu0 0.0
    %890 = vmatprep.subr.mxu0 0.0
    %891 = vmatpush1.msra.mxu0 0.0
    %892 = vmatprep.subr.mxu0 0.0
    %893 = vmatpush1.msra.mxu0 0.0
    %894 = vmatprep.subr.mxu0 0.0
    %895 = vmatpush1.msra.mxu0 0.0
    %896 = vmatprep.subr.mxu0 0.0
    %897 = vmatpush1.msra.mxu0 0.0
    %898 = vmatprep.subr.mxu0 0.0
    %899 = vmatpush1.msra.mxu0 0.0
    %900 = vmatprep.subr.mxu0 0.0
    %901 = vmatpush1.msra.mxu0 0.0
    %902 = vmatprep.subr.mxu0 0.0
    %903 = vmatpush1.msra.mxu0 0.0
    %904 = vmatprep.subr.mxu0 0.0
    %905 = vmatpush1.msra.mxu0 0.0
    %906 = vmatprep.subr.mxu0 0.0
    %907 = vmatpush1.msra.mxu0 0.0
    %908 = vmatprep.subr.mxu0 0.0
    %909 = vmatpush1.msra.mxu0 0.0
    %910 = vmatprep.subr.mxu0 0.0
    %911 = vmatpush1.msra.mxu0 0.0
    %912 = vmatprep.subr.mxu0 0.0
    %913 = vmatpush1.msra.mxu0 0.0
    %914 = vmatprep.subr.mxu0 0.0
    %915 = vmatpush1.msra.mxu0 0.0
    %916 = vmatprep.subr.mxu0 0.0
    %917 = vmatpush1.msra.mxu0 0.0
    %918 = vmatprep.subr.mxu0 0.0
    %919 = vmatpush1.msra.mxu0 0.0
    %920 = vmatprep.subr.mxu0 0.0
    %921 = vmatpush1.msra.mxu0 0.0
    %922 = vmatprep.subr.mxu0 0.0
    %923 = vmatpush1.msra.mxu0 0.0
    %924 = vmatprep.subr.mxu0 0.0
    %925 = vmatpush1.msra.mxu0 0.0
    %926 = vmatprep.subr.mxu0 0.0
    %927 = vmatpush1.msra.mxu0 0.0
    %928 = vmatprep.subr.mxu0 0.0
    %929 = vmatpush1.msra.mxu0 0.0
    %930 = vmatprep.subr.mxu0 0.0
    %931 = vmatpush1.msra.mxu0 0.0
    %932 = vmatprep.subr.mxu0 0.0
    %933 = vmatpush1.msra.mxu0 0.0
    %934 = vmatprep.subr.mxu0 0.0
    %935 = vmatpush1.msra.mxu0 0.0
    %936 = vmatprep.subr.mxu0 0.0
    %937 = vmatpush1.msra.mxu0 0.0
    %938 = vmatprep.subr.mxu0 0.0
    %939 = vmatpush1.msra.mxu0 0.0
    %940 = vmatprep.mubr.f32.mxu0 0.0
    %941 = vmatmul.mubr.f32.gmra.mrb[0].mxu0 %v872
    %v942 = vpop.f32.mrb[0].mxu0
    %v943 = vadd.f32 %v520, %v942
    %v944 = vpop.f32.mrb[0].mxu0
    %945 = vmatprep.mubr.f32.mxu0 0.0
    %946 = vmatmul.mubr.f32.gmra.mrb[0].mxu0 %v874
    %v947 = vpop.f32.mrb[0].mxu0
    %v948 = vadd.f32 %v520, %v947
    %v949 = vpop.f32.mrb[0].mxu0
    %950 = vdwg.mxu0
    %v951 = vlaneseq
    %v952 = vshrl.u32 %v951, 7
    %v953 = vsub.s32 0, %v952
    %v954 = vrot.slane %v865, %v953
    %v955 = vadd.f32 %v954, %v943
    %v956 = vadd.f32 %v954, %v948
    %v957 = vmax.f32 %v955, 0.0
    %v958 = vmax.f32 %v956, 0.0
    %959 = vst.msk [vmem:[#allocation2 + $0x1e] sm:$0xff] %vm613, %v957
    %960 = vst.msk [vmem:[#allocation2 + $0x26] sm:$0x3] %vm615, %v958
    %v961 = vlaneseq
    %v962 = vshrl.u32 %v961, 7
    %v963 = vsub.s32 1, %v962
    %v964 = vrot.slane %v865, %v963
    %v965 = vadd.f32 %v964, %v943
    %v966 = vadd.f32 %v964, %v948
    %v967 = vmax.f32 %v965, 0.0
    %v968 = vmax.f32 %v966, 0.0
    %969 = vst.msk [vmem:[#allocation2 + $0x28] sm:$0xff] %vm613, %v967
    %970 = vst.msk [vmem:[#allocation2 + $0x30] sm:$0x3] %vm615, %v968
    %v971 = vlaneseq
    %v972 = vshrl.u32 %v971, 7
    %v973 = vsub.s32 2, %v972
    %v974 = vrot.slane %v865, %v973
    %v975 = vadd.f32 %v974, %v943
    %v976 = vadd.f32 %v974, %v948
    %v977 = vmax.f32 %v975, 0.0
    %v978 = vmax.f32 %v976, 0.0
    %979 = vst.msk [vmem:[#allocation2 + $0x32] sm:$0xff] %vm613, %v977
    %980 = vst.msk [vmem:[#allocation2 + $0x3a] sm:$0x3] %vm615, %v978
    %v981 = vld [vmem:[#allocation2] sm:$0xff]
    %v982 = vld [vmem:[#allocation2 + $0x8] sm:$0xff]
    %v983 = vld [vmem:[#allocation2 + $0x10] sm:$0xff]
    %v984 = vld [vmem:[#allocation2 + $0x18] sm:$0xff]
    %v985 = vld [vmem:[#allocation2 + $0x20] sm:$0xff]
    %v986 = vld [vmem:[#allocation2 + $0x28] sm:$0xff]
    %v987 = vld [vmem:[#allocation2 + $0x30] sm:$0xff]
    %v988 = vld [vmem:[#allocation2 + $0x38] sm:$0xf]
    %v989 = vlaneseq
    %v990 = vshrl.u32 %v989, 7
    %v991 = vsub.s32 0, %v990
    %v992 = vrot.slane %v63, %v991
    %v994 = vsel %vm613, %v981, 0
    %v997 = vsel %vm613, %v982, 0
    %v1000 = vsel %vm613, %v983, 0
    %v1003 = vsel %vm613, %v984, 0
    %v1006 = vsel %vm613, %v985, 0
    %v1009 = vsel %vm613, %v986, 0
    %v1012 = vsel %vm613, %v987, 0
    %v1015 = vsel %vm613, %v988, 0
    %1017 = vmatprep.subr.mxu0 0.0
    %1018 = vmatpush1.msra.mxu0 %v50
    %1019 = vmatprep.subr.mxu0 0.0
    %1020 = vmatpush1.msra.mxu0 %v51
    %1021 = vmatprep.subr.mxu0 0.0
    %1022 = vmatpush1.msra.mxu0 %v52
    %1023 = vmatprep.subr.mxu0 0.0
    %1024 = vmatpush1.msra.mxu0 %v53
    %1025 = vmatprep.subr.mxu0 0.0
    %1026 = vmatpush1.msra.mxu0 %v54
    %1027 = vmatprep.subr.mxu0 0.0
    %1028 = vmatpush1.msra.mxu0 %v55
    %1029 = vmatprep.subr.mxu0 0.0
    %1030 = vmatpush1.msra.mxu0 %v56
    %1031 = vmatprep.subr.mxu0 0.0
    %1032 = vmatpush1.msra.mxu0 %v57
    %1033 = vmatprep.subr.mxu0 0.0
    %1034 = vmatpush1.msra.mxu0 0.0
    %1035 = vmatprep.subr.mxu0 0.0
    %1036 = vmatpush1.msra.mxu0 0.0
    %1037 = vmatprep.subr.mxu0 0.0
    %1038 = vmatpush1.msra.mxu0 0.0
    %1039 = vmatprep.subr.mxu0 0.0
    %1040 = vmatpush1.msra.mxu0 0.0
    %1041 = vmatprep.subr.mxu0 0.0
    %1042 = vmatpush1.msra.mxu0 0.0
    %1043 = vmatprep.subr.mxu0 0.0
    %1044 = vmatpush1.msra.mxu0 0.0
    %1045 = vmatprep.subr.mxu0 0.0
    %1046 = vmatpush1.msra.mxu0 0.0
    %1047 = vmatprep.subr.mxu0 0.0
    %1048 = vmatpush1.msra.mxu0 0.0
    %1049 = vmatprep.subr.mxu0 0.0
    %1050 = vmatpush1.msra.mxu0 0.0
    %1051 = vmatprep.subr.mxu0 0.0
    %1052 = vmatpush1.msra.mxu0 0.0
    %1053 = vmatprep.subr.mxu0 0.0
    %1054 = vmatpush1.msra.mxu0 0.0
    %1055 = vmatprep.subr.mxu0 0.0
    %1056 = vmatpush1.msra.mxu0 0.0
    %1057 = vmatprep.subr.mxu0 0.0
    %1058 = vmatpush1.msra.mxu0 0.0
    %1059 = vmatprep.subr.mxu0 0.0
    %1060 = vmatpush1.msra.mxu0 0.0
    %1061 = vmatprep.subr.mxu0 0.0
    %1062 = vmatpush1.msra.mxu0 0.0
    %1063 = vmatprep.subr.mxu0 0.0
    %1064 = vmatpush1.msra.mxu0 0.0
    %1065 = vmatprep.subr.mxu0 0.0
    %1066 = vmatpush1.msra.mxu0 0.0
    %1067 = vmatprep.subr.mxu0 0.0
    %1068 = vmatpush1.msra.mxu0 0.0
    %1069 = vmatprep.subr.mxu0 0.0
    %1070 = vmatpush1.msra.mxu0 0.0
    %1071 = vmatprep.subr.mxu0 0.0
    %1072 = vmatpush1.msra.mxu0 0.0
    %1073 = vmatprep.subr.mxu0 0.0
    %1074 = vmatpush1.msra.mxu0 0.0
    %1075 = vmatprep.subr.mxu0 0.0
    %1076 = vmatpush1.msra.mxu0 0.0
    %1077 = vmatprep.subr.mxu0 0.0
    %1078 = vmatpush1.msra.mxu0 0.0
    %1079 = vmatprep.subr.mxu0 0.0
    %1080 = vmatpush1.msra.mxu0 0.0
    %1081 = vmatprep.mubr.f32.mxu0 0.0
    %1082 = vmatmul.mubr.f32.gmra.mrb[0].mxu0 %v994
    %v1083 = vpop.f32.mrb[0].mxu0
    %v1084 = vadd.f32 %v992, %v1083
    %v1085 = vpop.f32.mrb[0].mxu0
    %1086 = vmatprep.mubr.f32.mxu0 0.0
    %1087 = vmatmul.mubr.f32.gmra.mrb[0].mxu0 %v997
    %v1088 = vpop.f32.mrb[0].mxu0
    %v1089 = vadd.f32 %v992, %v1088
    %v1090 = vpop.f32.mrb[0].mxu0
    %1091 = vmatprep.mubr.f32.mxu0 0.0
    %1092 = vmatmul.mubr.f32.gmra.mrb[0].mxu0 %v1000
    %v1093 = vpop.f32.mrb[0].mxu0
    %v1094 = vadd.f32 %v992, %v1093
    %v1095 = vpop.f32.mrb[0].mxu0
    %1096 = vmatprep.mubr.f32.mxu0 0.0
    %1097 = vmatmul.mubr.f32.gmra.mrb[0].mxu0 %v1003
    %v1098 = vpop.f32.mrb[0].mxu0
    %v1099 = vadd.f32 %v992, %v1098
    %v1100 = vpop.f32.mrb[0].mxu0
    %1101 = vmatprep.mubr.f32.mxu0 0.0
    %1102 = vmatmul.mubr.f32.gmra.mrb[0].mxu0 %v1006
    %v1103 = vpop.f32.mrb[0].mxu0
    %v1104 = vadd.f32 %v992, %v1103
    %v1105 = vpop.f32.mrb[0].mxu0
    %1106 = vmatprep.mubr.f32.mxu0 0.0
    %1107 = vmatmul.mubr.f32.gmra.mrb[0].mxu0 %v1009
    %v1108 = vpop.f32.mrb[0].mxu0
    %v1109 = vadd.f32 %v992, %v1108
    %v1110 = vpop.f32.mrb[0].mxu0
    %1111 = vmatprep.mubr.f32.mxu0 0.0
    %1112 = vmatmul.mubr.f32.gmra.mrb[0].mxu0 %v1012
    %v1113 = vpop.f32.mrb[0].mxu0
    %v1114 = vadd.f32 %v992, %v1113
    %v1115 = vpop.f32.mrb[0].mxu0
    %1116 = vmatprep.mubr.f32.mxu0 0.0
    %1117 = vmatmul.mubr.f32.gmra.mrb[0].mxu0 %v1015
    %v1118 = vpop.f32.mrb[0].mxu0
    %v1119 = vadd.f32 %v992, %v1118
    %v1120 = vpop.f32.mrb[0].mxu0
    %1121 = vdwg.mxu0
    %v1122 = vmax.f32 %v1084, 0.0
    %v1123 = vmax.f32 %v1089, 0.0
    %v1124 = vmax.f32 %v1094, 0.0
    %v1125 = vmax.f32 %v1099, 0.0
    %v1126 = vmax.f32 %v1104, 0.0
    %v1127 = vmax.f32 %v1109, 0.0
    %v1128 = vmax.f32 %v1114, 0.0
    %v1129 = vmax.f32 %v1119, 0.0
    %v1130 = vlaneseq
    %v1131 = vshrl.u32 %v1130, 7
    %v1132 = vsub.s32 0, %v1131
    %v1133 = vrot.slane %v64, %v1132
    %vm1134 = vcmask 80896
    %v1136 = vsel %vm1134, %v1122, 0
    %v1139 = vsel %vm1134, %v1123, 0
    %v1142 = vsel %vm1134, %v1124, 0
    %v1145 = vsel %vm1134, %v1125, 0
    %v1148 = vsel %vm1134, %v1126, 0
    %v1151 = vsel %vm1134, %v1127, 0
    %v1154 = vsel %vm1134, %v1128, 0
    %v1157 = vsel %vm1134, %v1129, 0
    %vm1159 = vcmask 1041408
    %v1161 = vsel %vm1159, %v59, 0
    %1163 = vmatprep.subr.mxu0 0.0
    %1164 = vmatpush1.msra.mxu0 %v58
    %1165 = vmatprep.subr.mxu0 0.0
    %1166 = vmatpush1.msra.mxu0 %v1161
    %1167 = vmatprep.subr.mxu0 0.0
    %1168 = vmatpush1.msra.mxu0 0.0
    %1169 = vmatprep.subr.mxu0 0.0
    %1170 = vmatpush1.msra.mxu0 0.0
    %1171 = vmatprep.subr.mxu0 0.0
    %1172 = vmatpush1.msra.mxu0 0.0
    %1173 = vmatprep.subr.mxu0 0.0
    %1174 = vmatpush1.msra.mxu0 0.0
    %1175 = vmatprep.subr.mxu0 0.0
    %1176 = vmatpush1.msra.mxu0 0.0
    %1177 = vmatprep.subr.mxu0 0.0
    %1178 = vmatpush1.msra.mxu0 0.0
    %1179 = vmatprep.subr.mxu0 0.0
    %1180 = vmatpush1.msra.mxu0 0.0
    %1181 = vmatprep.subr.mxu0 0.0
    %1182 = vmatpush1.msra.mxu0 0.0
    %1183 = vmatprep.subr.mxu0 0.0
    %1184 = vmatpush1.msra.mxu0 0.0
    %1185 = vmatprep.subr.mxu0 0.0
    %1186 = vmatpush1.msra.mxu0 0.0
    %1187 = vmatprep.subr.mxu0 0.0
    %1188 = vmatpush1.msra.mxu0 0.0
    %1189 = vmatprep.subr.mxu0 0.0
    %1190 = vmatpush1.msra.mxu0 0.0
    %1191 = vmatprep.subr.mxu0 0.0
    %1192 = vmatpush1.msra.mxu0 0.0
    %1193 = vmatprep.subr.mxu0 0.0
    %1194 = vmatpush1.msra.mxu0 0.0
    %1195 = vmatprep.subr.mxu0 0.0
    %1196 = vmatpush1.msra.mxu0 0.0
    %1197 = vmatprep.subr.mxu0 0.0
    %1198 = vmatpush1.msra.mxu0 0.0
    %1199 = vmatprep.subr.mxu0 0.0
    %1200 = vmatpush1.msra.mxu0 0.0
    %1201 = vmatprep.subr.mxu0 0.0
    %1202 = vmatpush1.msra.mxu0 0.0
    %1203 = vmatprep.subr.mxu0 0.0
    %1204 = vmatpush1.msra.mxu0 0.0
    %1205 = vmatprep.subr.mxu0 0.0
    %1206 = vmatpush1.msra.mxu0 0.0
    %1207 = vmatprep.subr.mxu0 0.0
    %1208 = vmatpush1.msra.mxu0 0.0
    %1209 = vmatprep.subr.mxu0 0.0
    %1210 = vmatpush1.msra.mxu0 0.0
    %1211 = vmatprep.subr.mxu0 0.0
    %1212 = vmatpush1.msra.mxu0 0.0
    %1213 = vmatprep.subr.mxu0 0.0
    %1214 = vmatpush1.msra.mxu0 0.0
    %1215 = vmatprep.subr.mxu0 0.0
    %1216 = vmatpush1.msra.mxu0 0.0
    %1217 = vmatprep.subr.mxu0 0.0
    %1218 = vmatpush1.msra.mxu0 0.0
    %1219 = vmatprep.subr.mxu0 0.0
    %1220 = vmatpush1.msra.mxu0 0.0
    %1221 = vmatprep.subr.mxu0 0.0
    %1222 = vmatpush1.msra.mxu0 0.0
    %1223 = vmatprep.subr.mxu0 0.0
    %1224 = vmatpush1.msra.mxu0 0.0
    %1225 = vmatprep.subr.mxu0 0.0
    %1226 = vmatpush1.msra.mxu0 0.0
    %1227 = vmatprep.mubr.f32.mxu0 0.0
    %1228 = vmatmul.mubr.f32.gmra.mrb[0].mxu0 %v1136
    %v1229 = vpop.f32.mrb[0].mxu0
    %v1230 = vadd.f32 %v1133, %v1229
    %v1231 = vpop.f32.mrb[0].mxu0
    %1232 = vmatprep.mubr.f32.mxu0 0.0
    %1233 = vmatmul.mubr.f32.gmra.mrb[0].mxu0 %v1139
    %v1234 = vpop.f32.mrb[0].mxu0
    %v1235 = vadd.f32 %v1133, %v1234
    %v1236 = vpop.f32.mrb[0].mxu0
    %1237 = vmatprep.mubr.f32.mxu0 0.0
    %1238 = vmatmul.mubr.f32.gmra.mrb[0].mxu0 %v1142
    %v1239 = vpop.f32.mrb[0].mxu0
    %v1240 = vadd.f32 %v1133, %v1239
    %v1241 = vpop.f32.mrb[0].mxu0
    %1242 = vmatprep.mubr.f32.mxu0 0.0
    %1243 = vmatmul.mubr.f32.gmra.mrb[0].mxu0 %v1145
    %v1244 = vpop.f32.mrb[0].mxu0
    %v1245 = vadd.f32 %v1133, %v1244
    %v1246 = vpop.f32.mrb[0].mxu0
    %1247 = vmatprep.mubr.f32.mxu0 0.0
    %1248 = vmatmul.mubr.f32.gmra.mrb[0].mxu0 %v1148
    %v1249 = vpop.f32.mrb[0].mxu0
    %v1250 = vadd.f32 %v1133, %v1249
    %v1251 = vpop.f32.mrb[0].mxu0
    %1252 = vmatprep.mubr.f32.mxu0 0.0
    %1253 = vmatmul.mubr.f32.gmra.mrb[0].mxu0 %v1151
    %v1254 = vpop.f32.mrb[0].mxu0
    %v1255 = vadd.f32 %v1133, %v1254
    %v1256 = vpop.f32.mrb[0].mxu0
    %1257 = vmatprep.mubr.f32.mxu0 0.0
    %1258 = vmatmul.mubr.f32.gmra.mrb[0].mxu0 %v1154
    %v1259 = vpop.f32.mrb[0].mxu0
    %v1260 = vadd.f32 %v1133, %v1259
    %v1261 = vpop.f32.mrb[0].mxu0
    %1262 = vmatprep.mubr.f32.mxu0 0.0
    %1263 = vmatmul.mubr.f32.gmra.mrb[0].mxu0 %v1157
    %v1264 = vpop.f32.mrb[0].mxu0
    %v1265 = vadd.f32 %v1133, %v1264
    %v1266 = vpop.f32.mrb[0].mxu0
    %1267 = vdwg.mxu0
    %vm1268 = vcmask 39936
    %1269 = vst.msk [vmem:[%s5] sm:$0xff] %vm1268, %v1230
    %1270 = vst.msk [vmem:[%s5 + $0x8] sm:$0xff] %vm1268, %v1235
    %1271 = vst.msk [vmem:[%s5 + $0x10] sm:$0xff] %vm1268, %v1240
    %1272 = vst.msk [vmem:[%s5 + $0x18] sm:$0xff] %vm1268, %v1245
    %1273 = vst.msk [vmem:[%s5 + $0x20] sm:$0xff] %vm1268, %v1250
    %1274 = vst.msk [vmem:[%s5 + $0x28] sm:$0xff] %vm1268, %v1255
    %1275 = vst.msk [vmem:[%s5 + $0x30] sm:$0xff] %vm1268, %v1260
    %vm1276 = vcmask 35840
    %1277 = vst.msk [vmem:[%s5 + $0x38] sm:$0xf] %vm1276, %v1265
    // Predicated region
    $region22: #{tpu_custom_call.1} parent=1 // pred_check
      _
    $region23: #{tpu_custom_call.1} parent=1 // pred_check_branch
      %1279 = sbr.rel (0) target = $region25
    $region24: #{tpu_custom_call.1} parent=1 // pred_region
      _
    $region25: #{tpu_custom_call.1} parent=1 // pred_fallthru
      _
    // Predicated region
    $region26: #{tpu_custom_call.1} parent=1 // pred_check
      _
    $region27: #{tpu_custom_call.1} parent=1 // pred_check_branch
      %1281 = sbr.rel (0) target = $region29
    $region28: #{tpu_custom_call.1} parent=1 // pred_region
      _
    $region29: #{tpu_custom_call.1} parent=1 // pred_fallthru
      _
    // Predicated region
    $region30: #{tpu_custom_call.1} parent=1 // pred_check
      _
    $region31: #{tpu_custom_call.1} parent=1 // pred_check_branch
      %1283 = sbr.rel (0) target = $region33
    $region32: #{tpu_custom_call.1} parent=1 // pred_region
      _
    $region33: #{tpu_custom_call.1} parent=1 // pred_fallthru
      _
    // Predicated region
    $region34: #{tpu_custom_call.1} parent=1 // pred_check
      _
    $region35: #{tpu_custom_call.1} parent=1 // pred_check_branch
      %1285 = sbr.rel (0) target = $region37
    $region36: #{tpu_custom_call.1} parent=1 // pred_region
      _
    $region37: #{tpu_custom_call.1} parent=1 // pred_fallthru
      _
    %1286 = vsyncpa [#allocation4], 1

</llo_original>
